<compile_context>
chip_gen: v6e
topology: v6e:2x2x1
jax: 0.10.0
libtpu: 0.0.40
codegen_flags: <defaults>
</compile_context>

<pallas_src>
import functools
import math

import jax
import jax.numpy as jnp
from jax import lax
from jax.experimental import pallas as pl
from jax.experimental.pallas import tpu as pltpu

# ----------------------------- model config ---------------------------------
D_MODEL = 32
NHEAD = 4
DIM_FF = 64
NUM_LAYERS = 2
SEQ = 8
BATCH = 2
LN_EPS = 1e-5

LANES = 128                      # lane width of both parameter slabs
B_ROWS_PER_LAYER = 8             # bqkv, bo, b1, b2, ln1_g, ln1_b, ln2_g, ln2_b

_VMEM = pl.BlockSpec(memory_space=pltpu.MemorySpace.VMEM)


# ------------------------------ fused kernel ---------------------------------
def _layer_norm(x, g, b, eps):
    mean = jnp.mean(x, axis=-1, keepdims=True)
    xc = x - mean
    var = jnp.mean(xc * xc, axis=-1, keepdims=True)
    return xc * lax.rsqrt(var + eps) * g + b


def _fused_transformer_kernel(
    x_ref, w_ref, b_ref, o_ref,
    *, num_layers, nhead, d_model, dim_ff, seq, batch, eps,
):
    dh = d_model // nhead
    n = seq * batch
    wrl = 3 * d_model + dim_ff          # weight-slab rows per layer
    brl = B_ROWS_PER_LAYER              # bias-slab rows per layer

    ws = w_ref[...]                     # (L*wrl, 128) bf16 packed weights
    bs = b_ref[...]                     # (L*8 + 8, 128) f32 packed biases / LN
    h = x_ref[...].astype(jnp.float32)  # (N, D) activation, on-chip whole pass

    # Additive same-batch mask for the token-flattened score matrix
    # (row r <-> (seq = r // batch, batch = r % batch)); hoisted out of layers.
    row_b = lax.broadcasted_iota(jnp.int32, (n, n), 0) % batch
    col_b = lax.broadcasted_iota(jnp.int32, (n, n), 1) % batch
    mask_add = jnp.where(row_b == col_b, 0.0, -1e30).astype(jnp.float32)

    for l in range(num_layers):         # tiny & static -> fully unrolled
        wb = l * wrl
        bb = l * brl
        # static slices of the loaded slabs (free at trace time)
        wqkv = ws[wb:wb + d_model, :3 * d_model]                         # (D, 3D)
        wo = ws[wb + d_model:wb + 2 * d_model, :d_model]                 # (D, D)
        w1 = ws[wb + 2 * d_model:wb + 3 * d_model, :dim_ff]              # (D, FF)
        w2 = ws[wb + 3 * d_model:wb + 3 * d_model + dim_ff, :d_model]    # (FF, D)
        bqkv = bs[bb + 0:bb + 1, :3 * d_model]
        bo = bs[bb + 1:bb + 2, :d_model]
        b1 = bs[bb + 2:bb + 3, :dim_ff]
        b2 = bs[bb + 3:bb + 4, :d_model]
        ln1g = bs[bb + 4:bb + 5, :d_model]
        ln1b = bs[bb + 5:bb + 6, :d_model]
        ln2g = bs[bb + 6:bb + 7, :d_model]
        ln2b = bs[bb + 7:bb + 8, :d_model]

        # -------- multi-head self attention (scale pre-folded into Q) --------
        qkv = jnp.dot(h.astype(jnp.bfloat16), wqkv,
                      preferred_element_type=jnp.float32) + bqkv          # (N, 3D)
        q = qkv[:, :d_model]
        k = qkv[:, d_model:2 * d_model]
        v = qkv[:, 2 * d_model:]

        attn = None
        for hd in range(nhead):
            sl = slice(hd * dh, (hd + 1) * dh)
            qh = q[:, sl].astype(jnp.bfloat16)
            kh = k[:, sl].astype(jnp.bfloat16)
            vh = v[:, sl].astype(jnp.bfloat16)
            s = lax.dot_general(qh, kh, (((1,), (1,)), ((), ())),
                                preferred_element_type=jnp.float32)       # (N, N)
            s = s + mask_add
            p = jnp.exp(s - jnp.max(s, axis=-1, keepdims=True))
            p = p / jnp.sum(p, axis=-1, keepdims=True)    # exact softmax divide
            ho = jnp.dot(p.astype(jnp.bfloat16), vh,
                         preferred_element_type=jnp.float32)              # (N, dh)
            # fold out-projection per head (no concatenate): Wo rows of this head
            contrib = jnp.dot(ho.astype(jnp.bfloat16), wo[sl, :],
                              preferred_element_type=jnp.float32)         # (N, D)
            attn = contrib if attn is None else attn + contrib
        attn = attn + bo

        # post-norm residual 1 (dropout1 == identity in eval)
        h = _layer_norm(h + attn, ln1g, ln1b, eps)

        # ------------------------------ FFN -----------------------------------
        ff = jnp.dot(h.astype(jnp.bfloat16), w1,
                     preferred_element_type=jnp.float32) + b1
        ff = jnp.maximum(ff, 0.0)                                          # ReLU
        ff = jnp.dot(ff.astype(jnp.bfloat16), w2,
                     preferred_element_type=jnp.float32) + b2

        # post-norm residual 2
        h = _layer_norm(h + ff, ln2g, ln2b, eps)

    # final encoder LayerNorm, single HBM writeback
    fr = num_layers * brl
    h = _layer_norm(h, bs[fr:fr + 1, :d_model], bs[fr + 1:fr + 2, :d_model], eps)
    o_ref[...] = h.astype(o_ref.dtype)


# ------------------------------ forward --------------------------------------
def transformer_forward(x, wslab, bslab, *, num_layers=NUM_LAYERS, nhead=NHEAD,
                        dim_ff=DIM_FF, eps=LN_EPS):
    """x: (seq, batch, d_model) -> (seq, batch, d_model)  (PyTorch semantics)."""
    S, B, D = x.shape
    N = S * B
    kernel = functools.partial(
        _fused_transformer_kernel,
        num_layers=num_layers, nhead=nhead, d_model=D, dim_ff=dim_ff,
        seq=S, batch=B, eps=eps,
    )
    out = pl.pallas_call(
        kernel,
        out_shape=jax.ShapeDtypeStruct((N, D), x.dtype),
        in_specs=[_VMEM, _VMEM, _VMEM],      # only 3 input DMAs total
        out_specs=_VMEM,
    )(x.reshape(N, D), wslab, bslab)
    return out.reshape(S, B, D)


# ---------------------------- parameter packing -------------------------------
def _xavier_uniform(key, shape):
    # PyTorch nn.Linear layout: shape = (d_out, d_in)
    fan_out, fan_in = shape
    limit = math.sqrt(6.0 / (fan_in + fan_out))
    return jax.random.uniform(key, shape, jnp.float32, -limit, limit)


def init_packed_params(key, d_model, nhead, dim_ff, num_layers):
    """Build the two kernel-side parameter slabs.

    Weight slab  (bf16, (L*(3*D+FF), 128)): per layer, row blocks
        [0:D)        Wqkv^T (D, 3D)   -- Q columns pre-scaled by 1/sqrt(dh)
        [D:2D)       Wo^T   (D, D)
        [2D:3D)      W1^T   (D, FF)
        [3D:3D+FF)   W2^T   (FF, D)
    Bias slab (f32, (L*8 + 8, 128)): per layer rows
        bqkv, bo, b1, b2, ln1_g, ln1_b, ln2_g, ln2_b ; then final_g, final_b.
    """
    dh = d_model // nhead
    scale = 1.0 / math.sqrt(dh)
    wrl = 3 * d_model + dim_ff

    wslab = jnp.zeros((num_layers * wrl, LANES), jnp.bfloat16)
    bslab = jnp.zeros((num_layers * B_ROWS_PER_LAYER + 8, LANES), jnp.float32)

    for l in range(num_layers):
        key, k1, k2, k3, k4, kb1, kb2 = jax.random.split(key, 7)
        wqkv = _xavier_uniform(k1, (3 * d_model, d_model)).T           # (D, 3D)
        wqkv = wqkv.at[:, :d_model].multiply(scale)                    # fold 1/sqrt(dh)
        wo = _xavier_uniform(k2, (d_model, d_model)).T                 # (D, D)
        w1 = _xavier_uniform(k3, (dim_ff, d_model)).T                  # (D, FF)
        w2 = _xavier_uniform(k4, (d_model, dim_ff)).T                  # (FF, D)

        wb = l * wrl
        wslab = wslab.at[wb:wb + d_model, :3 * d_model].set(wqkv.astype(jnp.bfloat16))
        wslab = wslab.at[wb + d_model:wb + 2 * d_model, :d_model].set(wo.astype(jnp.bfloat16))
        wslab = wslab.at[wb + 2 * d_model:wb + 3 * d_model, :dim_ff].set(w1.astype(jnp.bfloat16))
        wslab = wslab.at[wb + 3 * d_model:wb + 3 * d_model + dim_ff, :d_model].set(
            w2.astype(jnp.bfloat16))

        bb = l * B_ROWS_PER_LAYER
        # MHA in_proj / out_proj biases start at 0 (PyTorch); FFN biases uniform.
        b1 = jax.random.uniform(kb1, (dim_ff,), jnp.float32,
                                -1.0 / math.sqrt(d_model), 1.0 / math.sqrt(d_model))
        b2 = jax.random.uniform(kb2, (d_model,), jnp.float32,
                                -1.0 / math.sqrt(dim_ff), 1.0 / math.sqrt(dim_ff))
        bslab = bslab.at[bb + 2, :dim_ff].set(b1)
        bslab = bslab.at[bb + 3, :d_model].set(b2)
        bslab = bslab.at[bb + 4, :d_model].set(1.0)   # ln1 gamma
        bslab = bslab.at[bb + 6, :d_model].set(1.0)   # ln2 gamma

    fr = num_layers * B_ROWS_PER_LAYER
    bslab = bslab.at[fr, :d_model].set(1.0)           # final encoder LN gamma
    return wslab, bslab


# --------------------------------- main ---------------------------------------
if __name__ == "__main__":
    root = jax.random.PRNGKey(0)
    pkey, xkey = jax.random.split(root)

    wslab, bslab = init_packed_params(pkey, D_MODEL, NHEAD, DIM_FF, NUM_LAYERS)
    # input shape (seq, batch, d_model) == PyTorch batch_first=False convention
    x = jax.random.normal(xkey, (SEQ, BATCH, D_MODEL), dtype=jnp.float32)

    fwd = jax.jit(functools.partial(
        transformer_forward, num_layers=NUM_LAYERS, nhead=NHEAD, dim_ff=DIM_FF))
    out = jax.block_until_ready(fwd(x, wslab, bslab))

    assert out.shape == (SEQ, BATCH, D_MODEL)
    assert jnp.all(jnp.isfinite(out))
    print("KERNEL_OK")
</pallas_src>

<mosaic_0001>
module attributes {stable_mosaic.version = 11 : i64} {
  func.func @_fused_transformer_kernel(%arg0: memref<16x32xf32, #tpu.memory_space<vmem>>, %arg1: memref<320x128xbf16, #tpu.memory_space<vmem>>, %arg2: memref<24x128xf32, #tpu.memory_space<vmem>>, %arg3: memref<16x32xf32, #tpu.memory_space<vmem>>) attributes {dimension_semantics = [], scalar_prefetch = 0 : i64, scratch_operands = 0 : i64, tpu.core_type = #tpu.core_type<tc>} {
    %c0 = arith.constant 0 : index
    %c0_0 = arith.constant 0 : index
    %0 = vector.load %arg1[%c0, %c0_0] : memref<320x128xbf16, #tpu.memory_space<vmem>>, vector<320x128xbf16>
    %c0_1 = arith.constant 0 : index
    %c0_2 = arith.constant 0 : index
    %1 = vector.load %arg2[%c0_1, %c0_2] : memref<24x128xf32, #tpu.memory_space<vmem>>, vector<24x128xf32>
    %c0_3 = arith.constant 0 : index
    %c0_4 = arith.constant 0 : index
    %2 = vector.load %arg0[%c0_3, %c0_4] : memref<16x32xf32, #tpu.memory_space<vmem>>, vector<16x32xf32>
    %3 = tpu.iota {dimensions = array<i32: 0>} : vector<16x16xi32>
    %c2_i32 = arith.constant 2 : i32
    %c0_i32 = arith.constant 0 : i32
    %4 = arith.cmpi eq, %c2_i32, %c0_i32 : i32
    %c1_i32 = arith.constant 1 : i32
    %5 = arith.select %4, %c1_i32, %c2_i32 : i32
    %6 = vector.broadcast %5 : i32 to vector<16x16xi32>
    %7 = arith.remsi %3, %6 : vector<16x16xi32>
    %c0_i32_5 = arith.constant 0 : i32
    %8 = vector.broadcast %c0_i32_5 : i32 to vector<16x16xi32>
    %9 = arith.cmpi ne, %7, %8 : vector<16x16xi32>
    %c0_i32_6 = arith.constant 0 : i32
    %10 = vector.broadcast %c0_i32_6 : i32 to vector<16x16xi32>
    %11 = arith.cmpi slt, %7, %10 : vector<16x16xi32>
    %c0_i32_7 = arith.constant 0 : i32
    %12 = arith.cmpi slt, %5, %c0_i32_7 : i32
    %13 = vector.broadcast %12 : i1 to vector<16x16xi1>
    %14 = vector.broadcast %13 : vector<16x16xi1> to vector<16x16xi1>
    %15 = arith.xori %11, %14 : vector<16x16xi1>
    %16 = arith.andi %15, %9 : vector<16x16xi1>
    %17 = vector.broadcast %5 : i32 to vector<16x16xi32>
    %18 = arith.addi %7, %17 : vector<16x16xi32>
    %19 = arith.select %16, %18, %7 : vector<16x16xi1>, vector<16x16xi32>
    %20 = tpu.iota {dimensions = array<i32: 1>} : vector<16x16xi32>
    %c2_i32_8 = arith.constant 2 : i32
    %c0_i32_9 = arith.constant 0 : i32
    %21 = arith.cmpi eq, %c2_i32_8, %c0_i32_9 : i32
    %c1_i32_10 = arith.constant 1 : i32
    %22 = arith.select %21, %c1_i32_10, %c2_i32_8 : i32
    %23 = vector.broadcast %22 : i32 to vector<16x16xi32>
    %24 = arith.remsi %20, %23 : vector<16x16xi32>
    %c0_i32_11 = arith.constant 0 : i32
    %25 = vector.broadcast %c0_i32_11 : i32 to vector<16x16xi32>
    %26 = arith.cmpi ne, %24, %25 : vector<16x16xi32>
    %c0_i32_12 = arith.constant 0 : i32
    %27 = vector.broadcast %c0_i32_12 : i32 to vector<16x16xi32>
    %28 = arith.cmpi slt, %24, %27 : vector<16x16xi32>
    %c0_i32_13 = arith.constant 0 : i32
    %29 = arith.cmpi slt, %22, %c0_i32_13 : i32
    %30 = vector.broadcast %29 : i1 to vector<16x16xi1>
    %31 = vector.broadcast %30 : vector<16x16xi1> to vector<16x16xi1>
    %32 = arith.xori %28, %31 : vector<16x16xi1>
    %33 = arith.andi %32, %26 : vector<16x16xi1>
    %34 = vector.broadcast %22 : i32 to vector<16x16xi32>
    %35 = arith.addi %24, %34 : vector<16x16xi32>
    %36 = arith.select %33, %35, %24 : vector<16x16xi1>, vector<16x16xi32>
    %37 = arith.cmpi eq, %19, %36 : vector<16x16xi32>
    %cst = arith.constant 0.000000e+00 : f32
    %cst_14 = arith.constant -1.000000e+30 : f32
    %38 = vector.broadcast %cst : f32 to vector<16x16xf32>
    %39 = vector.broadcast %cst_14 : f32 to vector<16x16xf32>
    %40 = arith.select %37, %38, %39 : vector<16x16xi1>, vector<16x16xf32>
    %41 = vector.extract_strided_slice %0 {offsets = [0, 0], sizes = [32, 96], strides = [1, 1]} : vector<320x128xbf16> to vector<32x96xbf16>
    %42 = vector.extract_strided_slice %0 {offsets = [32, 0], sizes = [32, 32], strides = [1, 1]} : vector<320x128xbf16> to vector<32x32xbf16>
    %43 = vector.extract_strided_slice %0 {offsets = [64, 0], sizes = [32, 64], strides = [1, 1]} : vector<320x128xbf16> to vector<32x64xbf16>
    %44 = vector.extract_strided_slice %0 {offsets = [96, 0], sizes = [64, 32], strides = [1, 1]} : vector<320x128xbf16> to vector<64x32xbf16>
    %45 = vector.extract_strided_slice %1 {offsets = [0, 0], sizes = [1, 96], strides = [1, 1]} : vector<24x128xf32> to vector<1x96xf32>
    %46 = vector.extract_strided_slice %1 {offsets = [1, 0], sizes = [1, 32], strides = [1, 1]} : vector<24x128xf32> to vector<1x32xf32>
    %47 = vector.extract_strided_slice %1 {offsets = [2, 0], sizes = [1, 64], strides = [1, 1]} : vector<24x128xf32> to vector<1x64xf32>
    %48 = vector.extract_strided_slice %1 {offsets = [3, 0], sizes = [1, 32], strides = [1, 1]} : vector<24x128xf32> to vector<1x32xf32>
    %49 = vector.extract_strided_slice %1 {offsets = [4, 0], sizes = [1, 32], strides = [1, 1]} : vector<24x128xf32> to vector<1x32xf32>
    %50 = vector.extract_strided_slice %1 {offsets = [5, 0], sizes = [1, 32], strides = [1, 1]} : vector<24x128xf32> to vector<1x32xf32>
    %51 = vector.extract_strided_slice %1 {offsets = [6, 0], sizes = [1, 32], strides = [1, 1]} : vector<24x128xf32> to vector<1x32xf32>
    %52 = vector.extract_strided_slice %1 {offsets = [7, 0], sizes = [1, 32], strides = [1, 1]} : vector<24x128xf32> to vector<1x32xf32>
    %53 = arith.truncf %2 : vector<16x32xf32> to vector<16x32xbf16>
    %cst_15 = arith.constant dense<0.000000e+00> : vector<16x96xf32>
    %54 = tpu.matmul %53, %41, %cst_15 {dimension_numbers = #tpu.dot_dimension_numbers<[1], [0], [0], [1], [0, 0, 1, 1], [], []>} : vector<16x32xbf16>, vector<32x96xbf16>, vector<16x96xf32> -> vector<16x96xf32>
    %55 = vector.broadcast %45 : vector<1x96xf32> to vector<16x96xf32>
    %56 = arith.addf %54, %55 : vector<16x96xf32>
    %57 = vector.extract_strided_slice %56 {offsets = [0, 0], sizes = [16, 32], strides = [1, 1]} : vector<16x96xf32> to vector<16x32xf32>
    %58 = vector.extract_strided_slice %56 {offsets = [0, 32], sizes = [16, 32], strides = [1, 1]} : vector<16x96xf32> to vector<16x32xf32>
    %59 = vector.extract_strided_slice %56 {offsets = [0, 64], sizes = [16, 32], strides = [1, 1]} : vector<16x96xf32> to vector<16x32xf32>
    %60 = vector.extract_strided_slice %57 {offsets = [0, 0], sizes = [16, 8], strides = [1, 1]} : vector<16x32xf32> to vector<16x8xf32>
    %61 = arith.truncf %60 : vector<16x8xf32> to vector<16x8xbf16>
    %62 = vector.extract_strided_slice %58 {offsets = [0, 0], sizes = [16, 8], strides = [1, 1]} : vector<16x32xf32> to vector<16x8xf32>
    %63 = arith.truncf %62 : vector<16x8xf32> to vector<16x8xbf16>
    %64 = vector.extract_strided_slice %59 {offsets = [0, 0], sizes = [16, 8], strides = [1, 1]} : vector<16x32xf32> to vector<16x8xf32>
    %65 = arith.truncf %64 : vector<16x8xf32> to vector<16x8xbf16>
    %cst_16 = arith.constant dense<0.000000e+00> : vector<16x16xf32>
    %66 = tpu.matmul %61, %63, %cst_16 {dimension_numbers = #tpu.dot_dimension_numbers<[1], [1], [0], [0], [0, 0, 1, 0], [], []>} : vector<16x8xbf16>, vector<16x8xbf16>, vector<16x16xf32> -> vector<16x16xf32>
    %67 = arith.addf %66, %40 : vector<16x16xf32>
    %cst_17 = arith.constant dense<0xFF800000> : vector<16xf32>
    %68 = vector.multi_reduction <maximumf>, %67, %cst_17 [1] : vector<16x16xf32> to vector<16xf32>
    %69 = vector.shape_cast %68 : vector<16xf32> to vector<16x1xf32>
    %70 = vector.broadcast %69 : vector<16x1xf32> to vector<16x16xf32>
    %71 = arith.subf %67, %70 : vector<16x16xf32>
    %72 = math.exp %71 : vector<16x16xf32>
    %cst_18 = arith.constant dense<0.000000e+00> : vector<16xf32>
    %73 = vector.multi_reduction <add>, %72, %cst_18 [1] : vector<16x16xf32> to vector<16xf32>
    %74 = vector.shape_cast %73 : vector<16xf32> to vector<16x1xf32>
    %75 = vector.broadcast %74 : vector<16x1xf32> to vector<16x16xf32>
    %76 = arith.divf %72, %75 : vector<16x16xf32>
    %77 = arith.truncf %76 : vector<16x16xf32> to vector<16x16xbf16>
    %cst_19 = arith.constant dense<0.000000e+00> : vector<16x8xf32>
    %78 = tpu.matmul %77, %65, %cst_19 {dimension_numbers = #tpu.dot_dimension_numbers<[1], [0], [0], [1], [0, 0, 1, 1], [], []>} : vector<16x16xbf16>, vector<16x8xbf16>, vector<16x8xf32> -> vector<16x8xf32>
    %79 = arith.truncf %78 : vector<16x8xf32> to vector<16x8xbf16>
    %80 = vector.extract_strided_slice %42 {offsets = [0, 0], sizes = [8, 32], strides = [1, 1]} : vector<32x32xbf16> to vector<8x32xbf16>
    %cst_20 = arith.constant dense<0.000000e+00> : vector<16x32xf32>
    %81 = tpu.matmul %79, %80, %cst_20 {dimension_numbers = #tpu.dot_dimension_numbers<[1], [0], [0], [1], [0, 0, 1, 1], [], []>} : vector<16x8xbf16>, vector<8x32xbf16>, vector<16x32xf32> -> vector<16x32xf32>
    %82 = vector.extract_strided_slice %57 {offsets = [0, 8], sizes = [16, 8], strides = [1, 1]} : vector<16x32xf32> to vector<16x8xf32>
    %83 = arith.truncf %82 : vector<16x8xf32> to vector<16x8xbf16>
    %84 = vector.extract_strided_slice %58 {offsets = [0, 8], sizes = [16, 8], strides = [1, 1]} : vector<16x32xf32> to vector<16x8xf32>
    %85 = arith.truncf %84 : vector<16x8xf32> to vector<16x8xbf16>
    %86 = vector.extract_strided_slice %59 {offsets = [0, 8], sizes = [16, 8], strides = [1, 1]} : vector<16x32xf32> to vector<16x8xf32>
    %87 = arith.truncf %86 : vector<16x8xf32> to vector<16x8xbf16>
    %cst_21 = arith.constant dense<0.000000e+00> : vector<16x16xf32>
    %88 = tpu.matmul %83, %85, %cst_21 {dimension_numbers = #tpu.dot_dimension_numbers<[1], [1], [0], [0], [0, 0, 1, 0], [], []>} : vector<16x8xbf16>, vector<16x8xbf16>, vector<16x16xf32> -> vector<16x16xf32>
    %89 = arith.addf %88, %40 : vector<16x16xf32>
    %cst_22 = arith.constant dense<0xFF800000> : vector<16xf32>
    %90 = vector.multi_reduction <maximumf>, %89, %cst_22 [1] : vector<16x16xf32> to vector<16xf32>
    %91 = vector.shape_cast %90 : vector<16xf32> to vector<16x1xf32>
    %92 = vector.broadcast %91 : vector<16x1xf32> to vector<16x16xf32>
    %93 = arith.subf %89, %92 : vector<16x16xf32>
    %94 = math.exp %93 : vector<16x16xf32>
    %cst_23 = arith.constant dense<0.000000e+00> : vector<16xf32>
    %95 = vector.multi_reduction <add>, %94, %cst_23 [1] : vector<16x16xf32> to vector<16xf32>
    %96 = vector.shape_cast %95 : vector<16xf32> to vector<16x1xf32>
    %97 = vector.broadcast %96 : vector<16x1xf32> to vector<16x16xf32>
    %98 = arith.divf %94, %97 : vector<16x16xf32>
    %99 = arith.truncf %98 : vector<16x16xf32> to vector<16x16xbf16>
    %cst_24 = arith.constant dense<0.000000e+00> : vector<16x8xf32>
    %100 = tpu.matmul %99, %87, %cst_24 {dimension_numbers = #tpu.dot_dimension_numbers<[1], [0], [0], [1], [0, 0, 1, 1], [], []>} : vector<16x16xbf16>, vector<16x8xbf16>, vector<16x8xf32> -> vector<16x8xf32>
    %101 = arith.truncf %100 : vector<16x8xf32> to vector<16x8xbf16>
    %102 = vector.extract_strided_slice %42 {offsets = [8, 0], sizes = [8, 32], strides = [1, 1]} : vector<32x32xbf16> to vector<8x32xbf16>
    %cst_25 = arith.constant dense<0.000000e+00> : vector<16x32xf32>
    %103 = tpu.matmul %101, %102, %cst_25 {dimension_numbers = #tpu.dot_dimension_numbers<[1], [0], [0], [1], [0, 0, 1, 1], [], []>} : vector<16x8xbf16>, vector<8x32xbf16>, vector<16x32xf32> -> vector<16x32xf32>
    %104 = arith.addf %81, %103 : vector<16x32xf32>
    %105 = vector.extract_strided_slice %57 {offsets = [0, 16], sizes = [16, 8], strides = [1, 1]} : vector<16x32xf32> to vector<16x8xf32>
    %106 = arith.truncf %105 : vector<16x8xf32> to vector<16x8xbf16>
    %107 = vector.extract_strided_slice %58 {offsets = [0, 16], sizes = [16, 8], strides = [1, 1]} : vector<16x32xf32> to vector<16x8xf32>
    %108 = arith.truncf %107 : vector<16x8xf32> to vector<16x8xbf16>
    %109 = vector.extract_strided_slice %59 {offsets = [0, 16], sizes = [16, 8], strides = [1, 1]} : vector<16x32xf32> to vector<16x8xf32>
    %110 = arith.truncf %109 : vector<16x8xf32> to vector<16x8xbf16>
    %cst_26 = arith.constant dense<0.000000e+00> : vector<16x16xf32>
    %111 = tpu.matmul %106, %108, %cst_26 {dimension_numbers = #tpu.dot_dimension_numbers<[1], [1], [0], [0], [0, 0, 1, 0], [], []>} : vector<16x8xbf16>, vector<16x8xbf16>, vector<16x16xf32> -> vector<16x16xf32>
    %112 = arith.addf %111, %40 : vector<16x16xf32>
    %cst_27 = arith.constant dense<0xFF800000> : vector<16xf32>
    %113 = vector.multi_reduction <maximumf>, %112, %cst_27 [1] : vector<16x16xf32> to vector<16xf32>
    %114 = vector.shape_cast %113 : vector<16xf32> to vector<16x1xf32>
    %115 = vector.broadcast %114 : vector<16x1xf32> to vector<16x16xf32>
    %116 = arith.subf %112, %115 : vector<16x16xf32>
    %117 = math.exp %116 : vector<16x16xf32>
    %cst_28 = arith.constant dense<0.000000e+00> : vector<16xf32>
    %118 = vector.multi_reduction <add>, %117, %cst_28 [1] : vector<16x16xf32> to vector<16xf32>
    %119 = vector.shape_cast %118 : vector<16xf32> to vector<16x1xf32>
    %120 = vector.broadcast %119 : vector<16x1xf32> to vector<16x16xf32>
    %121 = arith.divf %117, %120 : vector<16x16xf32>
    %122 = arith.truncf %121 : vector<16x16xf32> to vector<16x16xbf16>
    %cst_29 = arith.constant dense<0.000000e+00> : vector<16x8xf32>
    %123 = tpu.matmul %122, %110, %cst_29 {dimension_numbers = #tpu.dot_dimension_numbers<[1], [0], [0], [1], [0, 0, 1, 1], [], []>} : vector<16x16xbf16>, vector<16x8xbf16>, vector<16x8xf32> -> vector<16x8xf32>
    %124 = arith.truncf %123 : vector<16x8xf32> to vector<16x8xbf16>
    %125 = vector.extract_strided_slice %42 {offsets = [16, 0], sizes = [8, 32], strides = [1, 1]} : vector<32x32xbf16> to vector<8x32xbf16>
    %cst_30 = arith.constant dense<0.000000e+00> : vector<16x32xf32>
    %126 = tpu.matmul %124, %125, %cst_30 {dimension_numbers = #tpu.dot_dimension_numbers<[1], [0], [0], [1], [0, 0, 1, 1], [], []>} : vector<16x8xbf16>, vector<8x32xbf16>, vector<16x32xf32> -> vector<16x32xf32>
    %127 = arith.addf %104, %126 : vector<16x32xf32>
    %128 = vector.extract_strided_slice %57 {offsets = [0, 24], sizes = [16, 8], strides = [1, 1]} : vector<16x32xf32> to vector<16x8xf32>
    %129 = arith.truncf %128 : vector<16x8xf32> to vector<16x8xbf16>
    %130 = vector.extract_strided_slice %58 {offsets = [0, 24], sizes = [16, 8], strides = [1, 1]} : vector<16x32xf32> to vector<16x8xf32>
    %131 = arith.truncf %130 : vector<16x8xf32> to vector<16x8xbf16>
    %132 = vector.extract_strided_slice %59 {offsets = [0, 24], sizes = [16, 8], strides = [1, 1]} : vector<16x32xf32> to vector<16x8xf32>
    %133 = arith.truncf %132 : vector<16x8xf32> to vector<16x8xbf16>
    %cst_31 = arith.constant dense<0.000000e+00> : vector<16x16xf32>
    %134 = tpu.matmul %129, %131, %cst_31 {dimension_numbers = #tpu.dot_dimension_numbers<[1], [1], [0], [0], [0, 0, 1, 0], [], []>} : vector<16x8xbf16>, vector<16x8xbf16>, vector<16x16xf32> -> vector<16x16xf32>
    %135 = arith.addf %134, %40 : vector<16x16xf32>
    %cst_32 = arith.constant dense<0xFF800000> : vector<16xf32>
    %136 = vector.multi_reduction <maximumf>, %135, %cst_32 [1] : vector<16x16xf32> to vector<16xf32>
    %137 = vector.shape_cast %136 : vector<16xf32> to vector<16x1xf32>
    %138 = vector.broadcast %137 : vector<16x1xf32> to vector<16x16xf32>
    %139 = arith.subf %135, %138 : vector<16x16xf32>
    %140 = math.exp %139 : vector<16x16xf32>
    %cst_33 = arith.constant dense<0.000000e+00> : vector<16xf32>
    %141 = vector.multi_reduction <add>, %140, %cst_33 [1] : vector<16x16xf32> to vector<16xf32>
    %142 = vector.shape_cast %141 : vector<16xf32> to vector<16x1xf32>
    %143 = vector.broadcast %142 : vector<16x1xf32> to vector<16x16xf32>
    %144 = arith.divf %140, %143 : vector<16x16xf32>
    %145 = arith.truncf %144 : vector<16x16xf32> to vector<16x16xbf16>
    %cst_34 = arith.constant dense<0.000000e+00> : vector<16x8xf32>
    %146 = tpu.matmul %145, %133, %cst_34 {dimension_numbers = #tpu.dot_dimension_numbers<[1], [0], [0], [1], [0, 0, 1, 1], [], []>} : vector<16x16xbf16>, vector<16x8xbf16>, vector<16x8xf32> -> vector<16x8xf32>
    %147 = arith.truncf %146 : vector<16x8xf32> to vector<16x8xbf16>
    %148 = vector.extract_strided_slice %42 {offsets = [24, 0], sizes = [8, 32], strides = [1, 1]} : vector<32x32xbf16> to vector<8x32xbf16>
    %cst_35 = arith.constant dense<0.000000e+00> : vector<16x32xf32>
    %149 = tpu.matmul %147, %148, %cst_35 {dimension_numbers = #tpu.dot_dimension_numbers<[1], [0], [0], [1], [0, 0, 1, 1], [], []>} : vector<16x8xbf16>, vector<8x32xbf16>, vector<16x32xf32> -> vector<16x32xf32>
    %150 = arith.addf %127, %149 : vector<16x32xf32>
    %151 = vector.broadcast %46 : vector<1x32xf32> to vector<16x32xf32>
    %152 = arith.addf %150, %151 : vector<16x32xf32>
    %153 = arith.addf %2, %152 : vector<16x32xf32>
    %cst_36 = arith.constant dense<0.000000e+00> : vector<16xf32>
    %154 = vector.multi_reduction <add>, %153, %cst_36 [1] : vector<16x32xf32> to vector<16xf32>
    %155 = vector.shape_cast %154 : vector<16xf32> to vector<16x1xf32>
    %cst_37 = arith.constant 3.200000e+01 : f32
    %156 = vector.broadcast %cst_37 : f32 to vector<16x1xf32>
    %157 = arith.divf %155, %156 : vector<16x1xf32>
    %158 = vector.broadcast %157 : vector<16x1xf32> to vector<16x32xf32>
    %159 = arith.subf %153, %158 : vector<16x32xf32>
    %160 = arith.mulf %159, %159 : vector<16x32xf32>
    %cst_38 = arith.constant dense<0.000000e+00> : vector<16xf32>
    %161 = vector.multi_reduction <add>, %160, %cst_38 [1] : vector<16x32xf32> to vector<16xf32>
    %162 = vector.shape_cast %161 : vector<16xf32> to vector<16x1xf32>
    %cst_39 = arith.constant 3.200000e+01 : f32
    %163 = vector.broadcast %cst_39 : f32 to vector<16x1xf32>
    %164 = arith.divf %162, %163 : vector<16x1xf32>
    %cst_40 = arith.constant 9.99999974E-6 : f32
    %165 = vector.broadcast %cst_40 : f32 to vector<16x1xf32>
    %166 = arith.addf %164, %165 : vector<16x1xf32>
    %167 = math.rsqrt %166 : vector<16x1xf32>
    %168 = vector.broadcast %167 : vector<16x1xf32> to vector<16x32xf32>
    %169 = arith.mulf %159, %168 : vector<16x32xf32>
    %170 = vector.broadcast %49 : vector<1x32xf32> to vector<16x32xf32>
    %171 = arith.mulf %169, %170 : vector<16x32xf32>
    %172 = vector.broadcast %50 : vector<1x32xf32> to vector<16x32xf32>
    %173 = arith.addf %171, %172 : vector<16x32xf32>
    %174 = arith.truncf %173 : vector<16x32xf32> to vector<16x32xbf16>
    %cst_41 = arith.constant dense<0.000000e+00> : vector<16x64xf32>
    %175 = tpu.matmul %174, %43, %cst_41 {dimension_numbers = #tpu.dot_dimension_numbers<[1], [0], [0], [1], [0, 0, 1, 1], [], []>} : vector<16x32xbf16>, vector<32x64xbf16>, vector<16x64xf32> -> vector<16x64xf32>
    %176 = vector.broadcast %47 : vector<1x64xf32> to vector<16x64xf32>
    %177 = arith.addf %175, %176 : vector<16x64xf32>
    %cst_42 = arith.constant 0.000000e+00 : f32
    %178 = vector.broadcast %cst_42 : f32 to vector<16x64xf32>
    %179 = arith.maximumf %177, %178 : vector<16x64xf32>
    %180 = arith.truncf %179 : vector<16x64xf32> to vector<16x64xbf16>
    %cst_43 = arith.constant dense<0.000000e+00> : vector<16x32xf32>
    %181 = tpu.matmul %180, %44, %cst_43 {dimension_numbers = #tpu.dot_dimension_numbers<[1], [0], [0], [1], [0, 0, 1, 1], [], []>} : vector<16x64xbf16>, vector<64x32xbf16>, vector<16x32xf32> -> vector<16x32xf32>
    %182 = vector.broadcast %48 : vector<1x32xf32> to vector<16x32xf32>
    %183 = arith.addf %181, %182 : vector<16x32xf32>
    %184 = arith.addf %173, %183 : vector<16x32xf32>
    %cst_44 = arith.constant dense<0.000000e+00> : vector<16xf32>
    %185 = vector.multi_reduction <add>, %184, %cst_44 [1] : vector<16x32xf32> to vector<16xf32>
    %186 = vector.shape_cast %185 : vector<16xf32> to vector<16x1xf32>
    %cst_45 = arith.constant 3.200000e+01 : f32
    %187 = vector.broadcast %cst_45 : f32 to vector<16x1xf32>
    %188 = arith.divf %186, %187 : vector<16x1xf32>
    %189 = vector.broadcast %188 : vector<16x1xf32> to vector<16x32xf32>
    %190 = arith.subf %184, %189 : vector<16x32xf32>
    %191 = arith.mulf %190, %190 : vector<16x32xf32>
    %cst_46 = arith.constant dense<0.000000e+00> : vector<16xf32>
    %192 = vector.multi_reduction <add>, %191, %cst_46 [1] : vector<16x32xf32> to vector<16xf32>
    %193 = vector.shape_cast %192 : vector<16xf32> to vector<16x1xf32>
    %cst_47 = arith.constant 3.200000e+01 : f32
    %194 = vector.broadcast %cst_47 : f32 to vector<16x1xf32>
    %195 = arith.divf %193, %194 : vector<16x1xf32>
    %cst_48 = arith.constant 9.99999974E-6 : f32
    %196 = vector.broadcast %cst_48 : f32 to vector<16x1xf32>
    %197 = arith.addf %195, %196 : vector<16x1xf32>
    %198 = math.rsqrt %197 : vector<16x1xf32>
    %199 = vector.broadcast %198 : vector<16x1xf32> to vector<16x32xf32>
    %200 = arith.mulf %190, %199 : vector<16x32xf32>
    %201 = vector.broadcast %51 : vector<1x32xf32> to vector<16x32xf32>
    %202 = arith.mulf %200, %201 : vector<16x32xf32>
    %203 = vector.broadcast %52 : vector<1x32xf32> to vector<16x32xf32>
    %204 = arith.addf %202, %203 : vector<16x32xf32>
    %205 = vector.extract_strided_slice %0 {offsets = [160, 0], sizes = [32, 96], strides = [1, 1]} : vector<320x128xbf16> to vector<32x96xbf16>
    %206 = vector.extract_strided_slice %0 {offsets = [192, 0], sizes = [32, 32], strides = [1, 1]} : vector<320x128xbf16> to vector<32x32xbf16>
    %207 = vector.extract_strided_slice %0 {offsets = [224, 0], sizes = [32, 64], strides = [1, 1]} : vector<320x128xbf16> to vector<32x64xbf16>
    %208 = vector.extract_strided_slice %0 {offsets = [256, 0], sizes = [64, 32], strides = [1, 1]} : vector<320x128xbf16> to vector<64x32xbf16>
    %209 = vector.extract_strided_slice %1 {offsets = [8, 0], sizes = [1, 96], strides = [1, 1]} : vector<24x128xf32> to vector<1x96xf32>
    %210 = vector.extract_strided_slice %1 {offsets = [9, 0], sizes = [1, 32], strides = [1, 1]} : vector<24x128xf32> to vector<1x32xf32>
    %211 = vector.extract_strided_slice %1 {offsets = [10, 0], sizes = [1, 64], strides = [1, 1]} : vector<24x128xf32> to vector<1x64xf32>
    %212 = vector.extract_strided_slice %1 {offsets = [11, 0], sizes = [1, 32], strides = [1, 1]} : vector<24x128xf32> to vector<1x32xf32>
    %213 = vector.extract_strided_slice %1 {offsets = [12, 0], sizes = [1, 32], strides = [1, 1]} : vector<24x128xf32> to vector<1x32xf32>
    %214 = vector.extract_strided_slice %1 {offsets = [13, 0], sizes = [1, 32], strides = [1, 1]} : vector<24x128xf32> to vector<1x32xf32>
    %215 = vector.extract_strided_slice %1 {offsets = [14, 0], sizes = [1, 32], strides = [1, 1]} : vector<24x128xf32> to vector<1x32xf32>
    %216 = vector.extract_strided_slice %1 {offsets = [15, 0], sizes = [1, 32], strides = [1, 1]} : vector<24x128xf32> to vector<1x32xf32>
    %217 = arith.truncf %204 : vector<16x32xf32> to vector<16x32xbf16>
    %cst_49 = arith.constant dense<0.000000e+00> : vector<16x96xf32>
    %218 = tpu.matmul %217, %205, %cst_49 {dimension_numbers = #tpu.dot_dimension_numbers<[1], [0], [0], [1], [0, 0, 1, 1], [], []>} : vector<16x32xbf16>, vector<32x96xbf16>, vector<16x96xf32> -> vector<16x96xf32>
    %219 = vector.broadcast %209 : vector<1x96xf32> to vector<16x96xf32>
    %220 = arith.addf %218, %219 : vector<16x96xf32>
    %221 = vector.extract_strided_slice %220 {offsets = [0, 0], sizes = [16, 32], strides = [1, 1]} : vector<16x96xf32> to vector<16x32xf32>
    %222 = vector.extract_strided_slice %220 {offsets = [0, 32], sizes = [16, 32], strides = [1, 1]} : vector<16x96xf32> to vector<16x32xf32>
    %223 = vector.extract_strided_slice %220 {offsets = [0, 64], sizes = [16, 32], strides = [1, 1]} : vector<16x96xf32> to vector<16x32xf32>
    %224 = vector.extract_strided_slice %221 {offsets = [0, 0], sizes = [16, 8], strides = [1, 1]} : vector<16x32xf32> to vector<16x8xf32>
    %225 = arith.truncf %224 : vector<16x8xf32> to vector<16x8xbf16>
    %226 = vector.extract_strided_slice %222 {offsets = [0, 0], sizes = [16, 8], strides = [1, 1]} : vector<16x32xf32> to vector<16x8xf32>
    %227 = arith.truncf %226 : vector<16x8xf32> to vector<16x8xbf16>
    %228 = vector.extract_strided_slice %223 {offsets = [0, 0], sizes = [16, 8], strides = [1, 1]} : vector<16x32xf32> to vector<16x8xf32>
    %229 = arith.truncf %228 : vector<16x8xf32> to vector<16x8xbf16>
    %cst_50 = arith.constant dense<0.000000e+00> : vector<16x16xf32>
    %230 = tpu.matmul %225, %227, %cst_50 {dimension_numbers = #tpu.dot_dimension_numbers<[1], [1], [0], [0], [0, 0, 1, 0], [], []>} : vector<16x8xbf16>, vector<16x8xbf16>, vector<16x16xf32> -> vector<16x16xf32>
    %231 = arith.addf %230, %40 : vector<16x16xf32>
    %cst_51 = arith.constant dense<0xFF800000> : vector<16xf32>
    %232 = vector.multi_reduction <maximumf>, %231, %cst_51 [1] : vector<16x16xf32> to vector<16xf32>
    %233 = vector.shape_cast %232 : vector<16xf32> to vector<16x1xf32>
    %234 = vector.broadcast %233 : vector<16x1xf32> to vector<16x16xf32>
    %235 = arith.subf %231, %234 : vector<16x16xf32>
    %236 = math.exp %235 : vector<16x16xf32>
    %cst_52 = arith.constant dense<0.000000e+00> : vector<16xf32>
    %237 = vector.multi_reduction <add>, %236, %cst_52 [1] : vector<16x16xf32> to vector<16xf32>
    %238 = vector.shape_cast %237 : vector<16xf32> to vector<16x1xf32>
    %239 = vector.broadcast %238 : vector<16x1xf32> to vector<16x16xf32>
    %240 = arith.divf %236, %239 : vector<16x16xf32>
    %241 = arith.truncf %240 : vector<16x16xf32> to vector<16x16xbf16>
    %cst_53 = arith.constant dense<0.000000e+00> : vector<16x8xf32>
    %242 = tpu.matmul %241, %229, %cst_53 {dimension_numbers = #tpu.dot_dimension_numbers<[1], [0], [0], [1], [0, 0, 1, 1], [], []>} : vector<16x16xbf16>, vector<16x8xbf16>, vector<16x8xf32> -> vector<16x8xf32>
    %243 = arith.truncf %242 : vector<16x8xf32> to vector<16x8xbf16>
    %244 = vector.extract_strided_slice %206 {offsets = [0, 0], sizes = [8, 32], strides = [1, 1]} : vector<32x32xbf16> to vector<8x32xbf16>
    %cst_54 = arith.constant dense<0.000000e+00> : vector<16x32xf32>
    %245 = tpu.matmul %243, %244, %cst_54 {dimension_numbers = #tpu.dot_dimension_numbers<[1], [0], [0], [1], [0, 0, 1, 1], [], []>} : vector<16x8xbf16>, vector<8x32xbf16>, vector<16x32xf32> -> vector<16x32xf32>
    %246 = vector.extract_strided_slice %221 {offsets = [0, 8], sizes = [16, 8], strides = [1, 1]} : vector<16x32xf32> to vector<16x8xf32>
    %247 = arith.truncf %246 : vector<16x8xf32> to vector<16x8xbf16>
    %248 = vector.extract_strided_slice %222 {offsets = [0, 8], sizes = [16, 8], strides = [1, 1]} : vector<16x32xf32> to vector<16x8xf32>
    %249 = arith.truncf %248 : vector<16x8xf32> to vector<16x8xbf16>
    %250 = vector.extract_strided_slice %223 {offsets = [0, 8], sizes = [16, 8], strides = [1, 1]} : vector<16x32xf32> to vector<16x8xf32>
    %251 = arith.truncf %250 : vector<16x8xf32> to vector<16x8xbf16>
    %cst_55 = arith.constant dense<0.000000e+00> : vector<16x16xf32>
    %252 = tpu.matmul %247, %249, %cst_55 {dimension_numbers = #tpu.dot_dimension_numbers<[1], [1], [0], [0], [0, 0, 1, 0], [], []>} : vector<16x8xbf16>, vector<16x8xbf16>, vector<16x16xf32> -> vector<16x16xf32>
    %253 = arith.addf %252, %40 : vector<16x16xf32>
    %cst_56 = arith.constant dense<0xFF800000> : vector<16xf32>
    %254 = vector.multi_reduction <maximumf>, %253, %cst_56 [1] : vector<16x16xf32> to vector<16xf32>
    %255 = vector.shape_cast %254 : vector<16xf32> to vector<16x1xf32>
    %256 = vector.broadcast %255 : vector<16x1xf32> to vector<16x16xf32>
    %257 = arith.subf %253, %256 : vector<16x16xf32>
    %258 = math.exp %257 : vector<16x16xf32>
    %cst_57 = arith.constant dense<0.000000e+00> : vector<16xf32>
    %259 = vector.multi_reduction <add>, %258, %cst_57 [1] : vector<16x16xf32> to vector<16xf32>
    %260 = vector.shape_cast %259 : vector<16xf32> to vector<16x1xf32>
    %261 = vector.broadcast %260 : vector<16x1xf32> to vector<16x16xf32>
    %262 = arith.divf %258, %261 : vector<16x16xf32>
    %263 = arith.truncf %262 : vector<16x16xf32> to vector<16x16xbf16>
    %cst_58 = arith.constant dense<0.000000e+00> : vector<16x8xf32>
    %264 = tpu.matmul %263, %251, %cst_58 {dimension_numbers = #tpu.dot_dimension_numbers<[1], [0], [0], [1], [0, 0, 1, 1], [], []>} : vector<16x16xbf16>, vector<16x8xbf16>, vector<16x8xf32> -> vector<16x8xf32>
    %265 = arith.truncf %264 : vector<16x8xf32> to vector<16x8xbf16>
    %266 = vector.extract_strided_slice %206 {offsets = [8, 0], sizes = [8, 32], strides = [1, 1]} : vector<32x32xbf16> to vector<8x32xbf16>
    %cst_59 = arith.constant dense<0.000000e+00> : vector<16x32xf32>
    %267 = tpu.matmul %265, %266, %cst_59 {dimension_numbers = #tpu.dot_dimension_numbers<[1], [0], [0], [1], [0, 0, 1, 1], [], []>} : vector<16x8xbf16>, vector<8x32xbf16>, vector<16x32xf32> -> vector<16x32xf32>
    %268 = arith.addf %245, %267 : vector<16x32xf32>
    %269 = vector.extract_strided_slice %221 {offsets = [0, 16], sizes = [16, 8], strides = [1, 1]} : vector<16x32xf32> to vector<16x8xf32>
    %270 = arith.truncf %269 : vector<16x8xf32> to vector<16x8xbf16>
    %271 = vector.extract_strided_slice %222 {offsets = [0, 16], sizes = [16, 8], strides = [1, 1]} : vector<16x32xf32> to vector<16x8xf32>
    %272 = arith.truncf %271 : vector<16x8xf32> to vector<16x8xbf16>
    %273 = vector.extract_strided_slice %223 {offsets = [0, 16], sizes = [16, 8], strides = [1, 1]} : vector<16x32xf32> to vector<16x8xf32>
    %274 = arith.truncf %273 : vector<16x8xf32> to vector<16x8xbf16>
    %cst_60 = arith.constant dense<0.000000e+00> : vector<16x16xf32>
    %275 = tpu.matmul %270, %272, %cst_60 {dimension_numbers = #tpu.dot_dimension_numbers<[1], [1], [0], [0], [0, 0, 1, 0], [], []>} : vector<16x8xbf16>, vector<16x8xbf16>, vector<16x16xf32> -> vector<16x16xf32>
    %276 = arith.addf %275, %40 : vector<16x16xf32>
    %cst_61 = arith.constant dense<0xFF800000> : vector<16xf32>
    %277 = vector.multi_reduction <maximumf>, %276, %cst_61 [1] : vector<16x16xf32> to vector<16xf32>
    %278 = vector.shape_cast %277 : vector<16xf32> to vector<16x1xf32>
    %279 = vector.broadcast %278 : vector<16x1xf32> to vector<16x16xf32>
    %280 = arith.subf %276, %279 : vector<16x16xf32>
    %281 = math.exp %280 : vector<16x16xf32>
    %cst_62 = arith.constant dense<0.000000e+00> : vector<16xf32>
    %282 = vector.multi_reduction <add>, %281, %cst_62 [1] : vector<16x16xf32> to vector<16xf32>
    %283 = vector.shape_cast %282 : vector<16xf32> to vector<16x1xf32>
    %284 = vector.broadcast %283 : vector<16x1xf32> to vector<16x16xf32>
    %285 = arith.divf %281, %284 : vector<16x16xf32>
    %286 = arith.truncf %285 : vector<16x16xf32> to vector<16x16xbf16>
    %cst_63 = arith.constant dense<0.000000e+00> : vector<16x8xf32>
    %287 = tpu.matmul %286, %274, %cst_63 {dimension_numbers = #tpu.dot_dimension_numbers<[1], [0], [0], [1], [0, 0, 1, 1], [], []>} : vector<16x16xbf16>, vector<16x8xbf16>, vector<16x8xf32> -> vector<16x8xf32>
    %288 = arith.truncf %287 : vector<16x8xf32> to vector<16x8xbf16>
    %289 = vector.extract_strided_slice %206 {offsets = [16, 0], sizes = [8, 32], strides = [1, 1]} : vector<32x32xbf16> to vector<8x32xbf16>
    %cst_64 = arith.constant dense<0.000000e+00> : vector<16x32xf32>
    %290 = tpu.matmul %288, %289, %cst_64 {dimension_numbers = #tpu.dot_dimension_numbers<[1], [0], [0], [1], [0, 0, 1, 1], [], []>} : vector<16x8xbf16>, vector<8x32xbf16>, vector<16x32xf32> -> vector<16x32xf32>
    %291 = arith.addf %268, %290 : vector<16x32xf32>
    %292 = vector.extract_strided_slice %221 {offsets = [0, 24], sizes = [16, 8], strides = [1, 1]} : vector<16x32xf32> to vector<16x8xf32>
    %293 = arith.truncf %292 : vector<16x8xf32> to vector<16x8xbf16>
    %294 = vector.extract_strided_slice %222 {offsets = [0, 24], sizes = [16, 8], strides = [1, 1]} : vector<16x32xf32> to vector<16x8xf32>
    %295 = arith.truncf %294 : vector<16x8xf32> to vector<16x8xbf16>
    %296 = vector.extract_strided_slice %223 {offsets = [0, 24], sizes = [16, 8], strides = [1, 1]} : vector<16x32xf32> to vector<16x8xf32>
    %297 = arith.truncf %296 : vector<16x8xf32> to vector<16x8xbf16>
    %cst_65 = arith.constant dense<0.000000e+00> : vector<16x16xf32>
    %298 = tpu.matmul %293, %295, %cst_65 {dimension_numbers = #tpu.dot_dimension_numbers<[1], [1], [0], [0], [0, 0, 1, 0], [], []>} : vector<16x8xbf16>, vector<16x8xbf16>, vector<16x16xf32> -> vector<16x16xf32>
    %299 = arith.addf %298, %40 : vector<16x16xf32>
    %cst_66 = arith.constant dense<0xFF800000> : vector<16xf32>
    %300 = vector.multi_reduction <maximumf>, %299, %cst_66 [1] : vector<16x16xf32> to vector<16xf32>
    %301 = vector.shape_cast %300 : vector<16xf32> to vector<16x1xf32>
    %302 = vector.broadcast %301 : vector<16x1xf32> to vector<16x16xf32>
    %303 = arith.subf %299, %302 : vector<16x16xf32>
    %304 = math.exp %303 : vector<16x16xf32>
    %cst_67 = arith.constant dense<0.000000e+00> : vector<16xf32>
    %305 = vector.multi_reduction <add>, %304, %cst_67 [1] : vector<16x16xf32> to vector<16xf32>
    %306 = vector.shape_cast %305 : vector<16xf32> to vector<16x1xf32>
    %307 = vector.broadcast %306 : vector<16x1xf32> to vector<16x16xf32>
    %308 = arith.divf %304, %307 : vector<16x16xf32>
    %309 = arith.truncf %308 : vector<16x16xf32> to vector<16x16xbf16>
    %cst_68 = arith.constant dense<0.000000e+00> : vector<16x8xf32>
    %310 = tpu.matmul %309, %297, %cst_68 {dimension_numbers = #tpu.dot_dimension_numbers<[1], [0], [0], [1], [0, 0, 1, 1], [], []>} : vector<16x16xbf16>, vector<16x8xbf16>, vector<16x8xf32> -> vector<16x8xf32>
    %311 = arith.truncf %310 : vector<16x8xf32> to vector<16x8xbf16>
    %312 = vector.extract_strided_slice %206 {offsets = [24, 0], sizes = [8, 32], strides = [1, 1]} : vector<32x32xbf16> to vector<8x32xbf16>
    %cst_69 = arith.constant dense<0.000000e+00> : vector<16x32xf32>
    %313 = tpu.matmul %311, %312, %cst_69 {dimension_numbers = #tpu.dot_dimension_numbers<[1], [0], [0], [1], [0, 0, 1, 1], [], []>} : vector<16x8xbf16>, vector<8x32xbf16>, vector<16x32xf32> -> vector<16x32xf32>
    %314 = arith.addf %291, %313 : vector<16x32xf32>
    %315 = vector.broadcast %210 : vector<1x32xf32> to vector<16x32xf32>
    %316 = arith.addf %314, %315 : vector<16x32xf32>
    %317 = arith.addf %204, %316 : vector<16x32xf32>
    %cst_70 = arith.constant dense<0.000000e+00> : vector<16xf32>
    %318 = vector.multi_reduction <add>, %317, %cst_70 [1] : vector<16x32xf32> to vector<16xf32>
    %319 = vector.shape_cast %318 : vector<16xf32> to vector<16x1xf32>
    %cst_71 = arith.constant 3.200000e+01 : f32
    %320 = vector.broadcast %cst_71 : f32 to vector<16x1xf32>
    %321 = arith.divf %319, %320 : vector<16x1xf32>
    %322 = vector.broadcast %321 : vector<16x1xf32> to vector<16x32xf32>
    %323 = arith.subf %317, %322 : vector<16x32xf32>
    %324 = arith.mulf %323, %323 : vector<16x32xf32>
    %cst_72 = arith.constant dense<0.000000e+00> : vector<16xf32>
    %325 = vector.multi_reduction <add>, %324, %cst_72 [1] : vector<16x32xf32> to vector<16xf32>
    %326 = vector.shape_cast %325 : vector<16xf32> to vector<16x1xf32>
    %cst_73 = arith.constant 3.200000e+01 : f32
    %327 = vector.broadcast %cst_73 : f32 to vector<16x1xf32>
    %328 = arith.divf %326, %327 : vector<16x1xf32>
    %cst_74 = arith.constant 9.99999974E-6 : f32
    %329 = vector.broadcast %cst_74 : f32 to vector<16x1xf32>
    %330 = arith.addf %328, %329 : vector<16x1xf32>
    %331 = math.rsqrt %330 : vector<16x1xf32>
    %332 = vector.broadcast %331 : vector<16x1xf32> to vector<16x32xf32>
    %333 = arith.mulf %323, %332 : vector<16x32xf32>
    %334 = vector.broadcast %213 : vector<1x32xf32> to vector<16x32xf32>
    %335 = arith.mulf %333, %334 : vector<16x32xf32>
    %336 = vector.broadcast %214 : vector<1x32xf32> to vector<16x32xf32>
    %337 = arith.addf %335, %336 : vector<16x32xf32>
    %338 = arith.truncf %337 : vector<16x32xf32> to vector<16x32xbf16>
    %cst_75 = arith.constant dense<0.000000e+00> : vector<16x64xf32>
    %339 = tpu.matmul %338, %207, %cst_75 {dimension_numbers = #tpu.dot_dimension_numbers<[1], [0], [0], [1], [0, 0, 1, 1], [], []>} : vector<16x32xbf16>, vector<32x64xbf16>, vector<16x64xf32> -> vector<16x64xf32>
    %340 = vector.broadcast %211 : vector<1x64xf32> to vector<16x64xf32>
    %341 = arith.addf %339, %340 : vector<16x64xf32>
    %cst_76 = arith.constant 0.000000e+00 : f32
    %342 = vector.broadcast %cst_76 : f32 to vector<16x64xf32>
    %343 = arith.maximumf %341, %342 : vector<16x64xf32>
    %344 = arith.truncf %343 : vector<16x64xf32> to vector<16x64xbf16>
    %cst_77 = arith.constant dense<0.000000e+00> : vector<16x32xf32>
    %345 = tpu.matmul %344, %208, %cst_77 {dimension_numbers = #tpu.dot_dimension_numbers<[1], [0], [0], [1], [0, 0, 1, 1], [], []>} : vector<16x64xbf16>, vector<64x32xbf16>, vector<16x32xf32> -> vector<16x32xf32>
    %346 = vector.broadcast %212 : vector<1x32xf32> to vector<16x32xf32>
    %347 = arith.addf %345, %346 : vector<16x32xf32>
    %348 = arith.addf %337, %347 : vector<16x32xf32>
    %cst_78 = arith.constant dense<0.000000e+00> : vector<16xf32>
    %349 = vector.multi_reduction <add>, %348, %cst_78 [1] : vector<16x32xf32> to vector<16xf32>
    %350 = vector.shape_cast %349 : vector<16xf32> to vector<16x1xf32>
    %cst_79 = arith.constant 3.200000e+01 : f32
    %351 = vector.broadcast %cst_79 : f32 to vector<16x1xf32>
    %352 = arith.divf %350, %351 : vector<16x1xf32>
    %353 = vector.broadcast %352 : vector<16x1xf32> to vector<16x32xf32>
    %354 = arith.subf %348, %353 : vector<16x32xf32>
    %355 = arith.mulf %354, %354 : vector<16x32xf32>
    %cst_80 = arith.constant dense<0.000000e+00> : vector<16xf32>
    %356 = vector.multi_reduction <add>, %355, %cst_80 [1] : vector<16x32xf32> to vector<16xf32>
    %357 = vector.shape_cast %356 : vector<16xf32> to vector<16x1xf32>
    %cst_81 = arith.constant 3.200000e+01 : f32
    %358 = vector.broadcast %cst_81 : f32 to vector<16x1xf32>
    %359 = arith.divf %357, %358 : vector<16x1xf32>
    %cst_82 = arith.constant 9.99999974E-6 : f32
    %360 = vector.broadcast %cst_82 : f32 to vector<16x1xf32>
    %361 = arith.addf %359, %360 : vector<16x1xf32>
    %362 = math.rsqrt %361 : vector<16x1xf32>
    %363 = vector.broadcast %362 : vector<16x1xf32> to vector<16x32xf32>
    %364 = arith.mulf %354, %363 : vector<16x32xf32>
    %365 = vector.broadcast %215 : vector<1x32xf32> to vector<16x32xf32>
    %366 = arith.mulf %364, %365 : vector<16x32xf32>
    %367 = vector.broadcast %216 : vector<1x32xf32> to vector<16x32xf32>
    %368 = arith.addf %366, %367 : vector<16x32xf32>
    %369 = vector.extract_strided_slice %1 {offsets = [16, 0], sizes = [1, 32], strides = [1, 1]} : vector<24x128xf32> to vector<1x32xf32>
    %370 = vector.extract_strided_slice %1 {offsets = [17, 0], sizes = [1, 32], strides = [1, 1]} : vector<24x128xf32> to vector<1x32xf32>
    %cst_83 = arith.constant dense<0.000000e+00> : vector<16xf32>
    %371 = vector.multi_reduction <add>, %368, %cst_83 [1] : vector<16x32xf32> to vector<16xf32>
    %372 = vector.shape_cast %371 : vector<16xf32> to vector<16x1xf32>
    %cst_84 = arith.constant 3.200000e+01 : f32
    %373 = vector.broadcast %cst_84 : f32 to vector<16x1xf32>
    %374 = arith.divf %372, %373 : vector<16x1xf32>
    %375 = vector.broadcast %374 : vector<16x1xf32> to vector<16x32xf32>
    %376 = arith.subf %368, %375 : vector<16x32xf32>
    %377 = arith.mulf %376, %376 : vector<16x32xf32>
    %cst_85 = arith.constant dense<0.000000e+00> : vector<16xf32>
    %378 = vector.multi_reduction <add>, %377, %cst_85 [1] : vector<16x32xf32> to vector<16xf32>
    %379 = vector.shape_cast %378 : vector<16xf32> to vector<16x1xf32>
    %cst_86 = arith.constant 3.200000e+01 : f32
    %380 = vector.broadcast %cst_86 : f32 to vector<16x1xf32>
    %381 = arith.divf %379, %380 : vector<16x1xf32>
    %cst_87 = arith.constant 9.99999974E-6 : f32
    %382 = vector.broadcast %cst_87 : f32 to vector<16x1xf32>
    %383 = arith.addf %381, %382 : vector<16x1xf32>
    %384 = math.rsqrt %383 : vector<16x1xf32>
    %385 = vector.broadcast %384 : vector<16x1xf32> to vector<16x32xf32>
    %386 = arith.mulf %376, %385 : vector<16x32xf32>
    %387 = vector.broadcast %369 : vector<1x32xf32> to vector<16x32xf32>
    %388 = arith.mulf %386, %387 : vector<16x32xf32>
    %389 = vector.broadcast %370 : vector<1x32xf32> to vector<16x32xf32>
    %390 = arith.addf %388, %389 : vector<16x32xf32>
    %c0_88 = arith.constant 0 : index
    %c0_89 = arith.constant 0 : index
    %391 = vector.load %arg3[%c0_88, %c0_89] : memref<16x32xf32, #tpu.memory_space<vmem>>, vector<16x32xf32>
    tpu.vector_store %arg3[%c0_88, %c0_89], %390 {strides = array<i32>} : memref<16x32xf32, #tpu.memory_space<vmem>>, vector<16x32xf32>,
    return
  }
}

</mosaic_0001>

<llo_original>
// kernel: transformer_forward.1
$region0: #{transformer_forward.1}
  #allocation0 [shape = 'u32[]', space=smem, size = 0x4, offset = 0x4, fixed_abs, tag = 'smem constant byte address 0x4 - core index']
  #allocation1 [shape = 'u32[144,128]{1,0:T(1,128)}', space=vmem, size = 0x12000, scoped, tag = 'internal scratch']
  %s0 = inlined_call_operand.hbm [shape: f32[16,32], index: 0, kind: input, shape index: {}]
  %s1 = inlined_call_operand.hbm [shape: bf16[320,128], index: 1, kind: input, shape index: {}]
  %s2 = inlined_call_operand.hbm [shape: f32[24,128], index: 2, kind: input, shape index: {}]
  %s3 = inlined_call_operand.hbm [shape: f32[16,32], index: 3, kind: output, shape index: {}]
  %s4 = sld [smem:[#allocation0]]
  $region34: #{transformer_forward.1} parent=0
    _
  %s6 = ssub.s32 1, %s4
  %s7 = scalar_select 0, %s6, %s4
  $region1: #{transformer_forward.1} parent=0
    #allocation2 [shape = 'u8[8192]{0}', space=vmem, size = 0x2000, scoped, tag = 'input window, operand 0, single buffered']
    #allocation3 [shape = 's32[1]{0}', space=sflag, size = 0x4, scoped, tag = 'scoped memory for transformer_forward.1']
    #allocation4 [shape = 's32[1]{0}', space=sflag, size = 0x4, scoped, tag = 'scoped memory for transformer_forward.1']
    #allocation5 [shape = 'u8[81920]{0}', space=vmem, size = 0x14000, scoped, tag = 'input window, operand 1, single buffered']
    #allocation6 [shape = 's32[1]{0}', space=sflag, size = 0x4, scoped, tag = 'scoped memory for transformer_forward.1']
    #allocation7 [shape = 'u8[12288]{0}', space=vmem, size = 0x3000, scoped, tag = 'input window, operand 2, single buffered']
    #allocation8 [shape = 'u8[8192]{0}', space=vmem, size = 0x2000, scoped, tag = 'output window, operand 0, single buffered']
    %8 = vsyncpa [#allocation3], 0
    %9 = vsyncpa [#allocation6], 0
    %10 = vsyncpa [#allocation4], 0
    // Predicated region
    $region2: #{transformer_forward.1} parent=1 // pred_check
      _
    $region3: #{transformer_forward.1} parent=1 // pred_check_branch
      %12 = sbr.rel (0) target = $region5
    $region4: #{transformer_forward.1} parent=1 // pred_region
      %s14 = ssub.s32 256, 256
      %15 = vsyncadd [#allocation3], %s14
      %s16 = sshll.u32 [#allocation2], 4
      %s17 = int_to_ptr.vmem [resolvable:$true] %s16
      %22 = dma.hbm_to_vmem [thread:$0]  %s0, 256, %s17, [#allocation3], 128, 128, 8
    $region5: #{transformer_forward.1} parent=1 // pred_fallthru
      _
    // Predicated region
    $region6: #{transformer_forward.1} parent=1 // pred_check
      _
    $region7: #{transformer_forward.1} parent=1 // pred_check_branch
      %24 = sbr.rel (0) target = $region9
    $region8: #{transformer_forward.1} parent=1 // pred_region
      %s26 = ssub.s32 2560, 2560
      %27 = vsyncadd [#allocation6], %s26
      %s28 = sshll.u32 [#allocation5], 4
      %s29 = int_to_ptr.vmem [resolvable:$true] %s28
      %34 = dma.hbm_to_vmem [thread:$0]  %s1, 2560, %s29, [#allocation6], 64, 64, 4
    $region9: #{transformer_forward.1} parent=1 // pred_fallthru
      _
    // Predicated region
    $region10: #{transformer_forward.1} parent=1 // pred_check
      _
    $region11: #{transformer_forward.1} parent=1 // pred_check_branch
      %36 = sbr.rel (0) target = $region13
    $region12: #{transformer_forward.1} parent=1 // pred_region
      %s38 = ssub.s32 384, 384
      %39 = vsyncadd [#allocation6], %s38
      %s40 = sshll.u32 [#allocation7], 4
      %s41 = int_to_ptr.vmem [resolvable:$true] %s40
      %46 = dma.hbm_to_vmem [thread:$0]  %s2, 384, %s41, [#allocation6], 128, 128, 8
    $region13: #{transformer_forward.1} parent=1 // pred_fallthru
      _
    // Predicated region
    $region14: #{transformer_forward.1} parent=1 // pred_check
      _
    $region15: #{transformer_forward.1} parent=1 // pred_check_branch
      %48 = sbr.rel (0) target = $region17
    $region16: #{transformer_forward.1} parent=1 // pred_region
      %49 = dma.done [#allocation3], 256
    $region17: #{transformer_forward.1} parent=1 // pred_fallthru
      _
    // Predicated region
    $region18: #{transformer_forward.1} parent=1 // pred_check
      _
    $region19: #{transformer_forward.1} parent=1 // pred_check_branch
      %51 = sbr.rel (0) target = $region21
    $region20: #{transformer_forward.1} parent=1 // pred_region
      %52 = dma.done [#allocation6], 2560
    $region21: #{transformer_forward.1} parent=1 // pred_fallthru
      _
    // Predicated region
    $region22: #{transformer_forward.1} parent=1 // pred_check
      _
    $region23: #{transformer_forward.1} parent=1 // pred_check_branch
      %54 = sbr.rel (0) target = $region25
    $region24: #{transformer_forward.1} parent=1 // pred_region
      %55 = dma.done [#allocation6], 384
    $region25: #{transformer_forward.1} parent=1 // pred_fallthru
      _
    %v57 = vld [vmem:[#allocation5] sm:$0xf]
    %v58 = vld [vmem:[#allocation5 + $0x4] sm:$0xf]
    %v59 = vld [vmem:[#allocation5 + $0x8] sm:$0xf]
    %v60 = vld [vmem:[#allocation5 + $0xc] sm:$0xf]
    %v61 = vld [vmem:[#allocation5 + $0x10] sm:$0xf]
    %v62 = vld [vmem:[#allocation5 + $0x14] sm:$0xf]
    %v63 = vld [vmem:[#allocation5 + $0x18] sm:$0xf]
    %v64 = vld [vmem:[#allocation5 + $0x1c] sm:$0xf]
    %v65 = vld [vmem:[#allocation5 + $0x20] sm:$0xf]
    %v66 = vld [vmem:[#allocation5 + $0x24] sm:$0xf]
    %v67 = vld [vmem:[#allocation5 + $0x28] sm:$0xf]
    %v68 = vld [vmem:[#allocation5 + $0x2c] sm:$0xf]
    %v69 = vld [vmem:[#allocation5 + $0x30] sm:$0xf]
    %v70 = vld [vmem:[#allocation5 + $0x34] sm:$0xf]
    %v71 = vld [vmem:[#allocation5 + $0x38] sm:$0xf]
    %v72 = vld [vmem:[#allocation5 + $0x3c] sm:$0xf]
    %v73 = vld [vmem:[#allocation5 + $0x40] sm:$0xf]
    %v74 = vld [vmem:[#allocation5 + $0x44] sm:$0xf]
    %v75 = vld [vmem:[#allocation5 + $0x48] sm:$0xf]
    %v76 = vld [vmem:[#allocation5 + $0x4c] sm:$0xf]
    %v77 = vld [vmem:[#allocation5 + $0x50] sm:$0xf]
    %v78 = vld [vmem:[#allocation5 + $0x54] sm:$0xf]
    %v79 = vld [vmem:[#allocation5 + $0x58] sm:$0xf]
    %v80 = vld [vmem:[#allocation5 + $0x5c] sm:$0xf]
    %v81 = vld [vmem:[#allocation5 + $0x60] sm:$0xf]
    %v82 = vld [vmem:[#allocation5 + $0x64] sm:$0xf]
    %v83 = vld [vmem:[#allocation5 + $0x68] sm:$0xf]
    %v84 = vld [vmem:[#allocation5 + $0x6c] sm:$0xf]
    %v85 = vld [vmem:[#allocation5 + $0x70] sm:$0xf]
    %v86 = vld [vmem:[#allocation5 + $0x74] sm:$0xf]
    %v87 = vld [vmem:[#allocation5 + $0x78] sm:$0xf]
    %v88 = vld [vmem:[#allocation5 + $0x7c] sm:$0xf]
    %v89 = vld [vmem:[#allocation5 + $0x80] sm:$0xf]
    %v90 = vld [vmem:[#allocation5 + $0x84] sm:$0xf]
    %v91 = vld [vmem:[#allocation5 + $0x88] sm:$0xf]
    %v92 = vld [vmem:[#allocation5 + $0x8c] sm:$0xf]
    %v93 = vld [vmem:[#allocation5 + $0x90] sm:$0xf]
    %v94 = vld [vmem:[#allocation5 + $0x94] sm:$0xf]
    %v95 = vld [vmem:[#allocation5 + $0x98] sm:$0xf]
    %v96 = vld [vmem:[#allocation5 + $0x9c] sm:$0xf]
    %v97 = vld [vmem:[#allocation7] sm:$0xff]
    %v98 = vld [vmem:[#allocation7 + $0x8] sm:$0xff]
    %v99 = vld [vmem:[#allocation7 + $0x10] sm:$0xff]
    %v100 = vld [vmem:[#allocation2] sm:$0xff]
    %v101 = vld [vmem:[#allocation2 + $0x8] sm:$0xff]
    %v102 = vlaneseq
    %v103 = vshrl.u32 %v102, 7
    %v104 = vadd.s32 %v103, 8
    %vm105 = vcmp.lt.s32.totalorder %v103, 0
    %v106 = vsub.s32 0, %v103
    %v107 = vsel %vm105, %v106, %v103
    %v108 = vshrl.u32 %v107, 1
    %v109 = vand.u32 %v107, 1
    %v110 = vsub.s32 0, %v109
    %v111 = vsel %vm105, %v110, %v109
    %vm112 = vcmp.lt.s32.totalorder %v104, 0
    %v113 = vsub.s32 0, %v104
    %v114 = vsel %vm112, %v113, %v104
    %v115 = vshrl.u32 %v114, 1
    %v116 = vand.u32 %v114, 1
    %v117 = vsub.s32 0, %v116
    %v118 = vsel %vm112, %v117, %v116
    %vm119 = vcmp.ne.s32.totalorder %v111, 0
    %vm120 = vcmp.ne.s32.totalorder %v118, 0
    %vm121 = vcmp.lt.s32.totalorder %v111, 0
    %vm122 = vcmp.lt.s32.totalorder %v118, 0
    %vm123 = vmand %vm121, %vm119
    %vm124 = vmand %vm122, %vm120
    %v125 = vadd.s32 %v111, 2
    %v126 = vadd.s32 %v118, 2
    %v127 = vsel %vm123, %v125, %v111
    %v128 = vsel %vm124, %v126, %v118
    %v129 = vlaneseq
    %v130 = vand.u32 %v129, 127
    %vm131 = vcmp.lt.s32.totalorder %v130, 0
    %v132 = vsub.s32 0, %v130
    %v133 = vsel %vm131, %v132, %v130
    %v134 = vshrl.u32 %v133, 1
    %v135 = vand.u32 %v133, 1
    %v136 = vsub.s32 0, %v135
    %v137 = vsel %vm131, %v136, %v135
    %vm138 = vcmp.ne.s32.totalorder %v137, 0
    %vm139 = vcmp.lt.s32.totalorder %v137, 0
    %vm140 = vmand %vm139, %vm138
    %v141 = vadd.s32 %v137, 2
    %v142 = vsel %vm140, %v141, %v137
    %vm143 = vcmp.eq.s32.totalorder %v127, %v142
    %vm144 = vcmp.eq.s32.totalorder %v128, %v142
    %v145 = vsel %vm143, 0.0, -1e+30
    %v146 = vsel %vm144, 0.0, -1e+30
    %v147 = vpack.c.bf16 %v101, %v100
    %v148 = vlaneseq
    %v149 = vshrl.u32 %v148, 7
    %v150 = vsub.s32 0, %v149
    %v151 = vrot.slane %v97, %v150
    %v156 = vunpack.c.l.b16 %v57
    %v157 = vunpack.c.l.b16 %v58
    %v158 = vunpack.c.l.b16 %v59
    %v159 = vunpack.c.l.b16 %v60
    %v160 = vpack.c.b16 %v157, %v156
    %v161 = vpack.c.b16 %v159, %v158
    %vm164 = vcmask 261120
    %v166 = vsel %vm164, %v147, 0
    %168 = vmatprep.subr.bf16.mxu0 0
    %169 = vmatpush1.bf16.msra.mxu0 0
    %170 = vmatprep.subr.bf16.mxu0 0
    %171 = vmatpush1.bf16.msra.mxu0 0
    %172 = vmatprep.subr.bf16.mxu0 0
    %173 = vmatpush1.bf16.msra.mxu0 0
    %174 = vmatprep.subr.bf16.mxu0 0
    %175 = vmatpush1.bf16.msra.mxu0 0
    %176 = vmatprep.subr.bf16.mxu0 0
    %177 = vmatpush1.bf16.msra.mxu0 0
    %178 = vmatprep.subr.bf16.mxu0 0
    %179 = vmatpush1.bf16.msra.mxu0 0
    %180 = vmatprep.subr.bf16.mxu0 0
    %181 = vmatpush1.bf16.msra.mxu0 %v161
    %182 = vmatprep.subr.bf16.mxu0 0
    %183 = vmatpush1.bf16.msra.mxu0 %v160
    %184 = vmatprep.subr.bf16.mxu0 0
    %185 = vmatpush2.bf16.msra.mxu0 0
    %186 = vmatprep.subr.bf16.mxu0 0
    %187 = vmatpush2.bf16.msra.mxu0 0
    %188 = vmatprep.subr.bf16.mxu0 0
    %189 = vmatpush2.bf16.msra.mxu0 0
    %190 = vmatprep.subr.bf16.mxu0 0
    %191 = vmatpush2.bf16.msra.mxu0 0
    %192 = vmatprep.subr.bf16.mxu0 0
    %193 = vmatpush2.bf16.msra.mxu0 0
    %194 = vmatprep.subr.bf16.mxu0 0
    %195 = vmatpush2.bf16.msra.mxu0 0
    %196 = vmatprep.subr.bf16.mxu0 0
    %197 = vmatpush2.bf16.msra.mxu0 0
    %198 = vmatprep.subr.bf16.mxu0 0
    %199 = vmatpush2.bf16.msra.mxu0 0
    %200 = vmatprep.mubr.bf16.mxu0 0
    %201 = vmatmul.mubr.bf16.gmra.mxu0 %v166
    %v202 = vpop.f32.mrf.mxu0
    %v203 = vadd.f32 %v151, %v202
    %v204 = vpop.f32.mrf.mxu0
    %v205 = vpop.f32.mrf.mxu0
    %v206 = vadd.f32 %v151, %v205
    %v207 = vpop.f32.mrf.mxu0
    %208 = vdwg.mxu0
    %v209 = vpack.c.bf16 %v206, %v203
    %211 = vrot.lane.b32.xlu0 %v209, 96
    %v212 = vpop.permute.xlu0 %211
    %vm213 = vcmask 64512
    %v215 = vsel %vm213, %v209, 0
    %v218 = vsel %vm213, %v212, 0
    %220 = vmatprep.subr.bf16.mxu0 0
    %221 = vmatpush1.bf16.xpose.msra.mxu0 0
    %222 = vmatprep.subr.bf16.mxu0 0
    %223 = vmatpush1.bf16.xpose.msra.mxu0 0
    %224 = vmatprep.subr.bf16.mxu0 0
    %225 = vmatpush1.bf16.xpose.msra.mxu0 0
    %226 = vmatprep.subr.bf16.mxu0 0
    %227 = vmatpush1.bf16.xpose.msra.mxu0 0
    %228 = vmatprep.subr.bf16.mxu0 0
    %229 = vmatpush1.bf16.xpose.msra.mxu0 0
    %230 = vmatprep.subr.bf16.mxu0 0
    %231 = vmatpush1.bf16.xpose.msra.mxu0 0
    %232 = vmatprep.subr.bf16.mxu0 0
    %233 = vmatpush1.bf16.xpose.msra.mxu0 0
    %234 = vmatprep.subr.bf16.mxu0 0
    %235 = vmatpush1.bf16.xpose.msra.mxu0 %v218
    %236 = vmatprep.subr.bf16.mxu0 0
    %237 = vmatpush2.bf16.xpose.msra.mxu0 0
    %238 = vmatprep.subr.bf16.mxu0 0
    %239 = vmatpush2.bf16.xpose.msra.mxu0 0
    %240 = vmatprep.subr.bf16.mxu0 0
    %241 = vmatpush2.bf16.xpose.msra.mxu0 0
    %242 = vmatprep.subr.bf16.mxu0 0
    %243 = vmatpush2.bf16.xpose.msra.mxu0 0
    %244 = vmatprep.subr.bf16.mxu0 0
    %245 = vmatpush2.bf16.xpose.msra.mxu0 0
    %246 = vmatprep.subr.bf16.mxu0 0
    %247 = vmatpush2.bf16.xpose.msra.mxu0 0
    %248 = vmatprep.subr.bf16.mxu0 0
    %249 = vmatpush2.bf16.xpose.msra.mxu0 0
    %250 = vmatprep.subr.bf16.mxu0 0
    %251 = vmatpush2.bf16.xpose.msra.mxu0 0
    %252 = vmatprep.mubr.bf16.mxu0 0
    %253 = vmatmul.mubr.bf16.gmra.mxu0 %v215
    %v254 = vpop.f32.mrf.mxu0
    %v255 = vadd.f32 %v145, %v254
    %v256 = vpop.f32.mrf.mxu0
    %v257 = vpop.f32.mrf.mxu0
    %v258 = vadd.f32 %v146, %v257
    %v259 = vpop.f32.mrf.mxu0
    %260 = vdwg.mxu0
    %vm261 = vcmask 130048
    %v262 = vsel %vm261, %v255, -inf
    %263 = vmax.xlane.f32.xlu0 %v262
    %v264 = vpop.xlane.xlu0 %263
    %v265 = vsel %vm261, %v258, -inf
    %266 = vmax.xlane.f32.xlu0 %v265
    %v267 = vpop.xlane.xlu0 %266
    %v268 = vsub.f32 %v255, %v264
    %v269 = vsub.f32 %v258, %v267
    %v270 = vmul.f32 %v268, 1.442695
    %v271 = vpow.pop %v270
    %v272 = vmul.f32 %v269, 1.442695
    %v273 = vpow.pop %v272
    %v274 = vsel %vm261, %v271, 0.0
    %275 = vadd.xlane.f32.xlu0 %v274
    %v276 = vpop.xlane.xlu0 %275
    %v277 = vsel %vm261, %v273, 0.0
    %278 = vadd.xlane.f32.xlu0 %v277
    %v279 = vpop.xlane.xlu0 %278
    %v280 = vrcp.pop %v276
    %v281 = vmul.f32 %v271, %v280
    %v282 = vrcp.pop %v279
    %v283 = vmul.f32 %v273, %v282
    %v284 = vpack.c.bf16 %v283, %v281
    %285 = vrot.lane.b32.xlu0 %v209, 64
    %v286 = vpop.permute.xlu0 %285
    %v289 = vsel %vm261, %v284, 0
    %291 = vmatprep.subr.bf16.mxu0 0
    %292 = vmatpush1.bf16.msra.mxu0 0
    %293 = vmatprep.subr.bf16.mxu0 0
    %294 = vmatpush1.bf16.msra.mxu0 0
    %295 = vmatprep.subr.bf16.mxu0 0
    %296 = vmatpush1.bf16.msra.mxu0 0
    %297 = vmatprep.subr.bf16.mxu0 0
    %298 = vmatpush1.bf16.msra.mxu0 0
    %299 = vmatprep.subr.bf16.mxu0 0
    %300 = vmatpush1.bf16.msra.mxu0 0
    %301 = vmatprep.subr.bf16.mxu0 0
    %302 = vmatpush1.bf16.msra.mxu0 0
    %303 = vmatprep.subr.bf16.mxu0 0
    %304 = vmatpush1.bf16.msra.mxu0 0
    %305 = vmatprep.subr.bf16.mxu0 0
    %306 = vmatpush1.bf16.msra.mxu0 %v286
    %307 = vmatprep.subr.bf16.mxu0 0
    %308 = vmatpush2.bf16.msra.mxu0 0
    %309 = vmatprep.subr.bf16.mxu0 0
    %310 = vmatpush2.bf16.msra.mxu0 0
    %311 = vmatprep.subr.bf16.mxu0 0
    %312 = vmatpush2.bf16.msra.mxu0 0
    %313 = vmatprep.subr.bf16.mxu0 0
    %314 = vmatpush2.bf16.msra.mxu0 0
    %315 = vmatprep.subr.bf16.mxu0 0
    %316 = vmatpush2.bf16.msra.mxu0 0
    %317 = vmatprep.subr.bf16.mxu0 0
    %318 = vmatpush2.bf16.msra.mxu0 0
    %319 = vmatprep.subr.bf16.mxu0 0
    %320 = vmatpush2.bf16.msra.mxu0 0
    %321 = vmatprep.subr.bf16.mxu0 0
    %322 = vmatpush2.bf16.msra.mxu0 0
    %323 = vmatprep.mubr.bf16.mxu0 0
    %324 = vmatmul.mubr.bf16.gmra.mxu0 %v289
    %v325 = vpop.f32.mrf.mxu0
    %v326 = vadd.f32 0.0, %v325
    %v327 = vpop.f32.mrf.mxu0
    %v328 = vpop.f32.mrf.mxu0
    %v329 = vadd.f32 0.0, %v328
    %v330 = vpop.f32.mrf.mxu0
    %331 = vdwg.mxu0
    %v332 = vpack.c.bf16 %v329, %v326
    %333 = vrot.lane.b32.xlu0 %v209, 120
    %v334 = vpop.permute.xlu0 %333
    %335 = vrot.lane.b32.xlu0 %v209, 88
    %v336 = vpop.permute.xlu0 %335
    %v338 = vsel %vm213, %v334, 0
    %v341 = vsel %vm213, %v336, 0
    %343 = vmatprep.subr.bf16.mxu0 0
    %344 = vmatpush1.bf16.xpose.msra.mxu0 0
    %345 = vmatprep.subr.bf16.mxu0 0
    %346 = vmatpush1.bf16.xpose.msra.mxu0 0
    %347 = vmatprep.subr.bf16.mxu0 0
    %348 = vmatpush1.bf16.xpose.msra.mxu0 0
    %349 = vmatprep.subr.bf16.mxu0 0
    %350 = vmatpush1.bf16.xpose.msra.mxu0 0
    %351 = vmatprep.subr.bf16.mxu0 0
    %352 = vmatpush1.bf16.xpose.msra.mxu0 0
    %353 = vmatprep.subr.bf16.mxu0 0
    %354 = vmatpush1.bf16.xpose.msra.mxu0 0
    %355 = vmatprep.subr.bf16.mxu0 0
    %356 = vmatpush1.bf16.xpose.msra.mxu0 0
    %357 = vmatprep.subr.bf16.mxu0 0
    %358 = vmatpush1.bf16.xpose.msra.mxu0 %v341
    %359 = vmatprep.subr.bf16.mxu0 0
    %360 = vmatpush2.bf16.xpose.msra.mxu0 0
    %361 = vmatprep.subr.bf16.mxu0 0
    %362 = vmatpush2.bf16.xpose.msra.mxu0 0
    %363 = vmatprep.subr.bf16.mxu0 0
    %364 = vmatpush2.bf16.xpose.msra.mxu0 0
    %365 = vmatprep.subr.bf16.mxu0 0
    %366 = vmatpush2.bf16.xpose.msra.mxu0 0
    %367 = vmatprep.subr.bf16.mxu0 0
    %368 = vmatpush2.bf16.xpose.msra.mxu0 0
    %369 = vmatprep.subr.bf16.mxu0 0
    %370 = vmatpush2.bf16.xpose.msra.mxu0 0
    %371 = vmatprep.subr.bf16.mxu0 0
    %372 = vmatpush2.bf16.xpose.msra.mxu0 0
    %373 = vmatprep.subr.bf16.mxu0 0
    %374 = vmatpush2.bf16.xpose.msra.mxu0 0
    %375 = vmatprep.mubr.bf16.mxu0 0
    %376 = vmatmul.mubr.bf16.gmra.mxu0 %v338
    %v377 = vpop.f32.mrf.mxu0
    %v378 = vadd.f32 %v145, %v377
    %v379 = vpop.f32.mrf.mxu0
    %v380 = vpop.f32.mrf.mxu0
    %v381 = vadd.f32 %v146, %v380
    %v382 = vpop.f32.mrf.mxu0
    %383 = vdwg.mxu0
    %v384 = vsel %vm261, %v378, -inf
    %385 = vmax.xlane.f32.xlu0 %v384
    %v386 = vpop.xlane.xlu0 %385
    %v387 = vsel %vm261, %v381, -inf
    %388 = vmax.xlane.f32.xlu0 %v387
    %v389 = vpop.xlane.xlu0 %388
    %v390 = vsub.f32 %v378, %v386
    %v391 = vsub.f32 %v381, %v389
    %v392 = vmul.f32 %v390, 1.442695
    %v393 = vpow.pop %v392
    %v394 = vmul.f32 %v391, 1.442695
    %v395 = vpow.pop %v394
    %v396 = vsel %vm261, %v393, 0.0
    %397 = vadd.xlane.f32.xlu0 %v396
    %v398 = vpop.xlane.xlu0 %397
    %v399 = vsel %vm261, %v395, 0.0
    %400 = vadd.xlane.f32.xlu0 %v399
    %v401 = vpop.xlane.xlu0 %400
    %v402 = vrcp.pop %v398
    %v403 = vmul.f32 %v393, %v402
    %v404 = vrcp.pop %v401
    %v405 = vmul.f32 %v395, %v404
    %v406 = vpack.c.bf16 %v405, %v403
    %407 = vrot.lane.b32.xlu0 %v209, 56
    %v408 = vpop.permute.xlu0 %407
    %v411 = vsel %vm261, %v406, 0
    %413 = vmatprep.subr.bf16.mxu0 0
    %414 = vmatpush1.bf16.msra.mxu0 0
    %415 = vmatprep.subr.bf16.mxu0 0
    %416 = vmatpush1.bf16.msra.mxu0 0
    %417 = vmatprep.subr.bf16.mxu0 0
    %418 = vmatpush1.bf16.msra.mxu0 0
    %419 = vmatprep.subr.bf16.mxu0 0
    %420 = vmatpush1.bf16.msra.mxu0 0
    %421 = vmatprep.subr.bf16.mxu0 0
    %422 = vmatpush1.bf16.msra.mxu0 0
    %423 = vmatprep.subr.bf16.mxu0 0
    %424 = vmatpush1.bf16.msra.mxu0 0
    %425 = vmatprep.subr.bf16.mxu0 0
    %426 = vmatpush1.bf16.msra.mxu0 0
    %427 = vmatprep.subr.bf16.mxu0 0
    %428 = vmatpush1.bf16.msra.mxu0 %v408
    %429 = vmatprep.subr.bf16.mxu0 0
    %430 = vmatpush2.bf16.msra.mxu0 0
    %431 = vmatprep.subr.bf16.mxu0 0
    %432 = vmatpush2.bf16.msra.mxu0 0
    %433 = vmatprep.subr.bf16.mxu0 0
    %434 = vmatpush2.bf16.msra.mxu0 0
    %435 = vmatprep.subr.bf16.mxu0 0
    %436 = vmatpush2.bf16.msra.mxu0 0
    %437 = vmatprep.subr.bf16.mxu0 0
    %438 = vmatpush2.bf16.msra.mxu0 0
    %439 = vmatprep.subr.bf16.mxu0 0
    %440 = vmatpush2.bf16.msra.mxu0 0
    %441 = vmatprep.subr.bf16.mxu0 0
    %442 = vmatpush2.bf16.msra.mxu0 0
    %443 = vmatprep.subr.bf16.mxu0 0
    %444 = vmatpush2.bf16.msra.mxu0 0
    %445 = vmatprep.mubr.bf16.mxu0 0
    %446 = vmatmul.mubr.bf16.gmra.mxu0 %v411
    %v447 = vpop.f32.mrf.mxu0
    %v448 = vadd.f32 0.0, %v447
    %v449 = vpop.f32.mrf.mxu0
    %v450 = vpop.f32.mrf.mxu0
    %v451 = vadd.f32 0.0, %v450
    %v452 = vpop.f32.mrf.mxu0
    %453 = vdwg.mxu0
    %v454 = vpack.c.bf16 %v451, %v448
    %v456 = vsel %vm213, %v454, 0
    %vm458 = vcmask 1043456
    %v460 = vsel %vm458, %v62, 0
    %462 = vmatprep.subr.bf16.mxu0 0
    %463 = vmatpush1.bf16.msra.mxu0 0
    %464 = vmatprep.subr.bf16.mxu0 0
    %465 = vmatpush1.bf16.msra.mxu0 0
    %466 = vmatprep.subr.bf16.mxu0 0
    %467 = vmatpush1.bf16.msra.mxu0 0
    %468 = vmatprep.subr.bf16.mxu0 0
    %469 = vmatpush1.bf16.msra.mxu0 0
    %470 = vmatprep.subr.bf16.mxu0 0
    %471 = vmatpush1.bf16.msra.mxu0 0
    %472 = vmatprep.subr.bf16.mxu0 0
    %473 = vmatpush1.bf16.msra.mxu0 0
    %474 = vmatprep.subr.bf16.mxu0 0
    %475 = vmatpush1.bf16.msra.mxu0 0
    %476 = vmatprep.subr.bf16.mxu0 0
    %477 = vmatpush1.bf16.msra.mxu0 %v460
    %478 = vmatprep.subr.bf16.mxu0 0
    %479 = vmatpush2.bf16.msra.mxu0 0
    %480 = vmatprep.subr.bf16.mxu0 0
    %481 = vmatpush2.bf16.msra.mxu0 0
    %482 = vmatprep.subr.bf16.mxu0 0
    %483 = vmatpush2.bf16.msra.mxu0 0
    %484 = vmatprep.subr.bf16.mxu0 0
    %485 = vmatpush2.bf16.msra.mxu0 0
    %486 = vmatprep.subr.bf16.mxu0 0
    %487 = vmatpush2.bf16.msra.mxu0 0
    %488 = vmatprep.subr.bf16.mxu0 0
    %489 = vmatpush2.bf16.msra.mxu0 0
    %490 = vmatprep.subr.bf16.mxu0 0
    %491 = vmatpush2.bf16.msra.mxu0 0
    %492 = vmatprep.subr.bf16.mxu0 0
    %493 = vmatpush2.bf16.msra.mxu0 0
    %494 = vmatprep.mubr.bf16.mxu0 0
    %495 = vmatmul.mubr.bf16.gmra.mxu0 %v456
    %v496 = vpop.f32.mrf.mxu0
    %v497 = vadd.f32 0.0, %v496
    %v498 = vpop.f32.mrf.mxu0
    %v499 = vpop.f32.mrf.mxu0
    %v500 = vadd.f32 0.0, %v499
    %v501 = vpop.f32.mrf.mxu0
    %502 = vdwg.mxu0
    %v504 = vsel %vm213, %v332, 0
    %v507 = vsel %vm458, %v61, 0
    %509 = vmatprep.subr.bf16.mxu0 0
    %510 = vmatpush1.bf16.msra.mxu0 0
    %511 = vmatprep.subr.bf16.mxu0 0
    %512 = vmatpush1.bf16.msra.mxu0 0
    %513 = vmatprep.subr.bf16.mxu0 0
    %514 = vmatpush1.bf16.msra.mxu0 0
    %515 = vmatprep.subr.bf16.mxu0 0
    %516 = vmatpush1.bf16.msra.mxu0 0
    %517 = vmatprep.subr.bf16.mxu0 0
    %518 = vmatpush1.bf16.msra.mxu0 0
    %519 = vmatprep.subr.bf16.mxu0 0
    %520 = vmatpush1.bf16.msra.mxu0 0
    %521 = vmatprep.subr.bf16.mxu0 0
    %522 = vmatpush1.bf16.msra.mxu0 0
    %523 = vmatprep.subr.bf16.mxu0 0
    %524 = vmatpush1.bf16.msra.mxu0 %v507
    %525 = vmatprep.subr.bf16.mxu0 0
    %526 = vmatpush2.bf16.msra.mxu0 0
    %527 = vmatprep.subr.bf16.mxu0 0
    %528 = vmatpush2.bf16.msra.mxu0 0
    %529 = vmatprep.subr.bf16.mxu0 0
    %530 = vmatpush2.bf16.msra.mxu0 0
    %531 = vmatprep.subr.bf16.mxu0 0
    %532 = vmatpush2.bf16.msra.mxu0 0
    %533 = vmatprep.subr.bf16.mxu0 0
    %534 = vmatpush2.bf16.msra.mxu0 0
    %535 = vmatprep.subr.bf16.mxu0 0
    %536 = vmatpush2.bf16.msra.mxu0 0
    %537 = vmatprep.subr.bf16.mxu0 0
    %538 = vmatpush2.bf16.msra.mxu0 0
    %539 = vmatprep.subr.bf16.mxu0 0
    %540 = vmatpush2.bf16.msra.mxu0 0
    %541 = vmatprep.mubr.bf16.mxu0 0
    %542 = vmatmul.mubr.bf16.gmra.mxu0 %v504
    %v543 = vpop.f32.mrf.mxu0
    %v544 = vadd.f32 %v497, %v543
    %v545 = vpop.f32.mrf.mxu0
    %v546 = vpop.f32.mrf.mxu0
    %v547 = vadd.f32 %v500, %v546
    %v548 = vpop.f32.mrf.mxu0
    %549 = vdwg.mxu0
    %550 = vrot.lane.b32.xlu0 %v209, 112
    %v551 = vpop.permute.xlu0 %550
    %552 = vrot.lane.b32.xlu0 %v209, 80
    %v553 = vpop.permute.xlu0 %552
    %v555 = vsel %vm213, %v551, 0
    %v558 = vsel %vm213, %v553, 0
    %560 = vmatprep.subr.bf16.mxu0 0
    %561 = vmatpush1.bf16.xpose.msra.mxu0 0
    %562 = vmatprep.subr.bf16.mxu0 0
    %563 = vmatpush1.bf16.xpose.msra.mxu0 0
    %564 = vmatprep.subr.bf16.mxu0 0
    %565 = vmatpush1.bf16.xpose.msra.mxu0 0
    %566 = vmatprep.subr.bf16.mxu0 0
    %567 = vmatpush1.bf16.xpose.msra.mxu0 0
    %568 = vmatprep.subr.bf16.mxu0 0
    %569 = vmatpush1.bf16.xpose.msra.mxu0 0
    %570 = vmatprep.subr.bf16.mxu0 0
    %571 = vmatpush1.bf16.xpose.msra.mxu0 0
    %572 = vmatprep.subr.bf16.mxu0 0
    %573 = vmatpush1.bf16.xpose.msra.mxu0 0
    %574 = vmatprep.subr.bf16.mxu0 0
    %575 = vmatpush1.bf16.xpose.msra.mxu0 %v558
    %576 = vmatprep.subr.bf16.mxu0 0
    %577 = vmatpush2.bf16.xpose.msra.mxu0 0
    %578 = vmatprep.subr.bf16.mxu0 0
    %579 = vmatpush2.bf16.xpose.msra.mxu0 0
    %580 = vmatprep.subr.bf16.mxu0 0
    %581 = vmatpush2.bf16.xpose.msra.mxu0 0
    %582 = vmatprep.subr.bf16.mxu0 0
    %583 = vmatpush2.bf16.xpose.msra.mxu0 0
    %584 = vmatprep.subr.bf16.mxu0 0
    %585 = vmatpush2.bf16.xpose.msra.mxu0 0
    %586 = vmatprep.subr.bf16.mxu0 0
    %587 = vmatpush2.bf16.xpose.msra.mxu0 0
    %588 = vmatprep.subr.bf16.mxu0 0
    %589 = vmatpush2.bf16.xpose.msra.mxu0 0
    %590 = vmatprep.subr.bf16.mxu0 0
    %591 = vmatpush2.bf16.xpose.msra.mxu0 0
    %592 = vmatprep.mubr.bf16.mxu0 0
    %593 = vmatmul.mubr.bf16.gmra.mxu0 %v555
    %v594 = vpop.f32.mrf.mxu0
    %v595 = vadd.f32 %v145, %v594
    %v596 = vpop.f32.mrf.mxu0
    %v597 = vpop.f32.mrf.mxu0
    %v598 = vadd.f32 %v146, %v597
    %v599 = vpop.f32.mrf.mxu0
    %600 = vdwg.mxu0
    %v601 = vsel %vm261, %v595, -inf
    %602 = vmax.xlane.f32.xlu0 %v601
    %v603 = vpop.xlane.xlu0 %602
    %v604 = vsel %vm261, %v598, -inf
    %605 = vmax.xlane.f32.xlu0 %v604
    %v606 = vpop.xlane.xlu0 %605
    %v607 = vsub.f32 %v595, %v603
    %v608 = vsub.f32 %v598, %v606
    %v609 = vmul.f32 %v607, 1.442695
    %v610 = vpow.pop %v609
    %v611 = vmul.f32 %v608, 1.442695
    %v612 = vpow.pop %v611
    %v613 = vsel %vm261, %v610, 0.0
    %614 = vadd.xlane.f32.xlu0 %v613
    %v615 = vpop.xlane.xlu0 %614
    %v616 = vsel %vm261, %v612, 0.0
    %617 = vadd.xlane.f32.xlu0 %v616
    %v618 = vpop.xlane.xlu0 %617
    %v619 = vrcp.pop %v615
    %v620 = vmul.f32 %v610, %v619
    %v621 = vrcp.pop %v618
    %v622 = vmul.f32 %v612, %v621
    %v623 = vpack.c.bf16 %v622, %v620
    %624 = vrot.lane.b32.xlu0 %v209, 48
    %v625 = vpop.permute.xlu0 %624
    %v628 = vsel %vm261, %v623, 0
    %630 = vmatprep.subr.bf16.mxu0 0
    %631 = vmatpush1.bf16.msra.mxu0 0
    %632 = vmatprep.subr.bf16.mxu0 0
    %633 = vmatpush1.bf16.msra.mxu0 0
    %634 = vmatprep.subr.bf16.mxu0 0
    %635 = vmatpush1.bf16.msra.mxu0 0
    %636 = vmatprep.subr.bf16.mxu0 0
    %637 = vmatpush1.bf16.msra.mxu0 0
    %638 = vmatprep.subr.bf16.mxu0 0
    %639 = vmatpush1.bf16.msra.mxu0 0
    %640 = vmatprep.subr.bf16.mxu0 0
    %641 = vmatpush1.bf16.msra.mxu0 0
    %642 = vmatprep.subr.bf16.mxu0 0
    %643 = vmatpush1.bf16.msra.mxu0 0
    %644 = vmatprep.subr.bf16.mxu0 0
    %645 = vmatpush1.bf16.msra.mxu0 %v625
    %646 = vmatprep.subr.bf16.mxu0 0
    %647 = vmatpush2.bf16.msra.mxu0 0
    %648 = vmatprep.subr.bf16.mxu0 0
    %649 = vmatpush2.bf16.msra.mxu0 0
    %650 = vmatprep.subr.bf16.mxu0 0
    %651 = vmatpush2.bf16.msra.mxu0 0
    %652 = vmatprep.subr.bf16.mxu0 0
    %653 = vmatpush2.bf16.msra.mxu0 0
    %654 = vmatprep.subr.bf16.mxu0 0
    %655 = vmatpush2.bf16.msra.mxu0 0
    %656 = vmatprep.subr.bf16.mxu0 0
    %657 = vmatpush2.bf16.msra.mxu0 0
    %658 = vmatprep.subr.bf16.mxu0 0
    %659 = vmatpush2.bf16.msra.mxu0 0
    %660 = vmatprep.subr.bf16.mxu0 0
    %661 = vmatpush2.bf16.msra.mxu0 0
    %662 = vmatprep.mubr.bf16.mxu0 0
    %663 = vmatmul.mubr.bf16.gmra.mxu0 %v628
    %v664 = vpop.f32.mrf.mxu0
    %v665 = vadd.f32 0.0, %v664
    %v666 = vpop.f32.mrf.mxu0
    %v667 = vpop.f32.mrf.mxu0
    %v668 = vadd.f32 0.0, %v667
    %v669 = vpop.f32.mrf.mxu0
    %670 = vdwg.mxu0
    %v671 = vpack.c.bf16 %v668, %v665
    %v673 = vsel %vm213, %v671, 0
    %v676 = vsel %vm458, %v63, 0
    %678 = vmatprep.subr.bf16.mxu0 0
    %679 = vmatpush1.bf16.msra.mxu0 0
    %680 = vmatprep.subr.bf16.mxu0 0
    %681 = vmatpush1.bf16.msra.mxu0 0
    %682 = vmatprep.subr.bf16.mxu0 0
    %683 = vmatpush1.bf16.msra.mxu0 0
    %684 = vmatprep.subr.bf16.mxu0 0
    %685 = vmatpush1.bf16.msra.mxu0 0
    %686 = vmatprep.subr.bf16.mxu0 0
    %687 = vmatpush1.bf16.msra.mxu0 0
    %688 = vmatprep.subr.bf16.mxu0 0
    %689 = vmatpush1.bf16.msra.mxu0 0
    %690 = vmatprep.subr.bf16.mxu0 0
    %691 = vmatpush1.bf16.msra.mxu0 0
    %692 = vmatprep.subr.bf16.mxu0 0
    %693 = vmatpush1.bf16.msra.mxu0 %v676
    %694 = vmatprep.subr.bf16.mxu0 0
    %695 = vmatpush2.bf16.msra.mxu0 0
    %696 = vmatprep.subr.bf16.mxu0 0
    %697 = vmatpush2.bf16.msra.mxu0 0
    %698 = vmatprep.subr.bf16.mxu0 0
    %699 = vmatpush2.bf16.msra.mxu0 0
    %700 = vmatprep.subr.bf16.mxu0 0
    %701 = vmatpush2.bf16.msra.mxu0 0
    %702 = vmatprep.subr.bf16.mxu0 0
    %703 = vmatpush2.bf16.msra.mxu0 0
    %704 = vmatprep.subr.bf16.mxu0 0
    %705 = vmatpush2.bf16.msra.mxu0 0
    %706 = vmatprep.subr.bf16.mxu0 0
    %707 = vmatpush2.bf16.msra.mxu0 0
    %708 = vmatprep.subr.bf16.mxu0 0
    %709 = vmatpush2.bf16.msra.mxu0 0
    %710 = vmatprep.mubr.bf16.mxu0 0
    %711 = vmatmul.mubr.bf16.gmra.mxu0 %v673
    %v712 = vpop.f32.mrf.mxu0
    %v713 = vadd.f32 0.0, %v712
    %v714 = vpop.f32.mrf.mxu0
    %v715 = vpop.f32.mrf.mxu0
    %v716 = vadd.f32 0.0, %v715
    %v717 = vpop.f32.mrf.mxu0
    %718 = vdwg.mxu0
    %v719 = vadd.f32 %v544, %v713
    %v720 = vadd.f32 %v547, %v716
    %721 = vrot.lane.b32.xlu0 %v209, 104
    %v722 = vpop.permute.xlu0 %721
    %723 = vrot.lane.b32.xlu0 %v209, 72
    %v724 = vpop.permute.xlu0 %723
    %v726 = vsel %vm213, %v722, 0
    %v729 = vsel %vm213, %v724, 0
    %731 = vmatprep.subr.bf16.mxu0 0
    %732 = vmatpush1.bf16.xpose.msra.mxu0 0
    %733 = vmatprep.subr.bf16.mxu0 0
    %734 = vmatpush1.bf16.xpose.msra.mxu0 0
    %735 = vmatprep.subr.bf16.mxu0 0
    %736 = vmatpush1.bf16.xpose.msra.mxu0 0
    %737 = vmatprep.subr.bf16.mxu0 0
    %738 = vmatpush1.bf16.xpose.msra.mxu0 0
    %739 = vmatprep.subr.bf16.mxu0 0
    %740 = vmatpush1.bf16.xpose.msra.mxu0 0
    %741 = vmatprep.subr.bf16.mxu0 0
    %742 = vmatpush1.bf16.xpose.msra.mxu0 0
    %743 = vmatprep.subr.bf16.mxu0 0
    %744 = vmatpush1.bf16.xpose.msra.mxu0 0
    %745 = vmatprep.subr.bf16.mxu0 0
    %746 = vmatpush1.bf16.xpose.msra.mxu0 %v729
    %747 = vmatprep.subr.bf16.mxu0 0
    %748 = vmatpush2.bf16.xpose.msra.mxu0 0
    %749 = vmatprep.subr.bf16.mxu0 0
    %750 = vmatpush2.bf16.xpose.msra.mxu0 0
    %751 = vmatprep.subr.bf16.mxu0 0
    %752 = vmatpush2.bf16.xpose.msra.mxu0 0
    %753 = vmatprep.subr.bf16.mxu0 0
    %754 = vmatpush2.bf16.xpose.msra.mxu0 0
    %755 = vmatprep.subr.bf16.mxu0 0
    %756 = vmatpush2.bf16.xpose.msra.mxu0 0
    %757 = vmatprep.subr.bf16.mxu0 0
    %758 = vmatpush2.bf16.xpose.msra.mxu0 0
    %759 = vmatprep.subr.bf16.mxu0 0
    %760 = vmatpush2.bf16.xpose.msra.mxu0 0
    %761 = vmatprep.subr.bf16.mxu0 0
    %762 = vmatpush2.bf16.xpose.msra.mxu0 0
    %763 = vmatprep.mubr.bf16.mxu0 0
    %764 = vmatmul.mubr.bf16.gmra.mxu0 %v726
    %v765 = vpop.f32.mrf.mxu0
    %v766 = vadd.f32 %v145, %v765
    %v767 = vpop.f32.mrf.mxu0
    %v768 = vpop.f32.mrf.mxu0
    %v769 = vadd.f32 %v146, %v768
    %v770 = vpop.f32.mrf.mxu0
    %771 = vdwg.mxu0
    %v772 = vsel %vm261, %v766, -inf
    %773 = vmax.xlane.f32.xlu0 %v772
    %v774 = vpop.xlane.xlu0 %773
    %v775 = vsel %vm261, %v769, -inf
    %776 = vmax.xlane.f32.xlu0 %v775
    %v777 = vpop.xlane.xlu0 %776
    %v778 = vsub.f32 %v766, %v774
    %v779 = vsub.f32 %v769, %v777
    %v780 = vmul.f32 %v778, 1.442695
    %v781 = vpow.pop %v780
    %v782 = vmul.f32 %v779, 1.442695
    %v783 = vpow.pop %v782
    %v784 = vsel %vm261, %v781, 0.0
    %785 = vadd.xlane.f32.xlu0 %v784
    %v786 = vpop.xlane.xlu0 %785
    %v787 = vsel %vm261, %v783, 0.0
    %788 = vadd.xlane.f32.xlu0 %v787
    %v789 = vpop.xlane.xlu0 %788
    %v790 = vrcp.pop %v786
    %v791 = vmul.f32 %v781, %v790
    %v792 = vrcp.pop %v789
    %v793 = vmul.f32 %v783, %v792
    %v794 = vpack.c.bf16 %v793, %v791
    %795 = vrot.lane.b32.xlu0 %v209, 40
    %v796 = vpop.permute.xlu0 %795
    %v799 = vsel %vm261, %v794, 0
    %801 = vmatprep.subr.bf16.mxu0 0
    %802 = vmatpush1.bf16.msra.mxu0 0
    %803 = vmatprep.subr.bf16.mxu0 0
    %804 = vmatpush1.bf16.msra.mxu0 0
    %805 = vmatprep.subr.bf16.mxu0 0
    %806 = vmatpush1.bf16.msra.mxu0 0
    %807 = vmatprep.subr.bf16.mxu0 0
    %808 = vmatpush1.bf16.msra.mxu0 0
    %809 = vmatprep.subr.bf16.mxu0 0
    %810 = vmatpush1.bf16.msra.mxu0 0
    %811 = vmatprep.subr.bf16.mxu0 0
    %812 = vmatpush1.bf16.msra.mxu0 0
    %813 = vmatprep.subr.bf16.mxu0 0
    %814 = vmatpush1.bf16.msra.mxu0 0
    %815 = vmatprep.subr.bf16.mxu0 0
    %816 = vmatpush1.bf16.msra.mxu0 %v796
    %817 = vmatprep.subr.bf16.mxu0 0
    %818 = vmatpush2.bf16.msra.mxu0 0
    %819 = vmatprep.subr.bf16.mxu0 0
    %820 = vmatpush2.bf16.msra.mxu0 0
    %821 = vmatprep.subr.bf16.mxu0 0
    %822 = vmatpush2.bf16.msra.mxu0 0
    %823 = vmatprep.subr.bf16.mxu0 0
    %824 = vmatpush2.bf16.msra.mxu0 0
    %825 = vmatprep.subr.bf16.mxu0 0
    %826 = vmatpush2.bf16.msra.mxu0 0
    %827 = vmatprep.subr.bf16.mxu0 0
    %828 = vmatpush2.bf16.msra.mxu0 0
    %829 = vmatprep.subr.bf16.mxu0 0
    %830 = vmatpush2.bf16.msra.mxu0 0
    %831 = vmatprep.subr.bf16.mxu0 0
    %832 = vmatpush2.bf16.msra.mxu0 0
    %833 = vmatprep.mubr.bf16.mxu0 0
    %834 = vmatmul.mubr.bf16.gmra.mxu0 %v799
    %v835 = vpop.f32.mrf.mxu0
    %v836 = vadd.f32 0.0, %v835
    %v837 = vpop.f32.mrf.mxu0
    %v838 = vpop.f32.mrf.mxu0
    %v839 = vadd.f32 0.0, %v838
    %v840 = vpop.f32.mrf.mxu0
    %841 = vdwg.mxu0
    %v842 = vpack.c.bf16 %v839, %v836
    %v844 = vsel %vm213, %v842, 0
    %v847 = vsel %vm458, %v64, 0
    %849 = vmatprep.subr.bf16.mxu0 0
    %850 = vmatpush1.bf16.msra.mxu0 0
    %851 = vmatprep.subr.bf16.mxu0 0
    %852 = vmatpush1.bf16.msra.mxu0 0
    %853 = vmatprep.subr.bf16.mxu0 0
    %854 = vmatpush1.bf16.msra.mxu0 0
    %855 = vmatprep.subr.bf16.mxu0 0
    %856 = vmatpush1.bf16.msra.mxu0 0
    %857 = vmatprep.subr.bf16.mxu0 0
    %858 = vmatpush1.bf16.msra.mxu0 0
    %859 = vmatprep.subr.bf16.mxu0 0
    %860 = vmatpush1.bf16.msra.mxu0 0
    %861 = vmatprep.subr.bf16.mxu0 0
    %862 = vmatpush1.bf16.msra.mxu0 0
    %863 = vmatprep.subr.bf16.mxu0 0
    %864 = vmatpush1.bf16.msra.mxu0 %v847
    %865 = vmatprep.subr.bf16.mxu0 0
    %866 = vmatpush2.bf16.msra.mxu0 0
    %867 = vmatprep.subr.bf16.mxu0 0
    %868 = vmatpush2.bf16.msra.mxu0 0
    %869 = vmatprep.subr.bf16.mxu0 0
    %870 = vmatpush2.bf16.msra.mxu0 0
    %871 = vmatprep.subr.bf16.mxu0 0
    %872 = vmatpush2.bf16.msra.mxu0 0
    %873 = vmatprep.subr.bf16.mxu0 0
    %874 = vmatpush2.bf16.msra.mxu0 0
    %875 = vmatprep.subr.bf16.mxu0 0
    %876 = vmatpush2.bf16.msra.mxu0 0
    %877 = vmatprep.subr.bf16.mxu0 0
    %878 = vmatpush2.bf16.msra.mxu0 0
    %879 = vmatprep.subr.bf16.mxu0 0
    %880 = vmatpush2.bf16.msra.mxu0 0
    %881 = vmatprep.mubr.bf16.mxu0 0
    %882 = vmatmul.mubr.bf16.gmra.mxu0 %v844
    %v883 = vpop.f32.mrf.mxu0
    %v884 = vadd.f32 0.0, %v883
    %v885 = vpop.f32.mrf.mxu0
    %v886 = vpop.f32.mrf.mxu0
    %v887 = vadd.f32 0.0, %v886
    %v888 = vpop.f32.mrf.mxu0
    %889 = vdwg.mxu0
    %v890 = vadd.f32 %v719, %v884
    %v891 = vadd.f32 %v720, %v887
    %v892 = vlaneseq
    %v893 = vshrl.u32 %v892, 7
    %v894 = vsub.s32 1, %v893
    %v895 = vrot.slane %v97, %v894
    %v896 = vadd.f32 %v890, %v895
    %v897 = vadd.f32 %v891, %v895
    %v898 = vadd.f32 %v100, %v896
    %v899 = vadd.f32 %v101, %v897
    %v900 = vsel %vm164, %v898, 0.0
    %901 = vadd.xlane.f32.xlu0 %v900
    %v902 = vpop.xlane.xlu0 %901
    %v903 = vsel %vm164, %v899, 0.0
    %904 = vadd.xlane.f32.xlu0 %v903
    %v905 = vpop.xlane.xlu0 %904
    %v906 = vrcp.pop 32.0
    %v907 = vmul.f32 %v902, %v906
    %v908 = vmul.f32 %v905, %v906
    %v909 = vsub.f32 %v898, %v907
    %v910 = vsub.f32 %v899, %v908
    %v911 = vmul.f32 %v909, %v909
    %v912 = vmul.f32 %v910, %v910
    %v913 = vsel %vm164, %v911, 0.0
    %914 = vadd.xlane.f32.xlu0 %v913
    %v915 = vpop.xlane.xlu0 %914
    %v916 = vsel %vm164, %v912, 0.0
    %917 = vadd.xlane.f32.xlu0 %v916
    %v918 = vpop.xlane.xlu0 %917
    %v919 = vmul.f32 %v915, %v906
    %v920 = vmul.f32 %v918, %v906
    %v921 = vadd.f32 %v919, 1e-05
    %v922 = vadd.f32 %v920, 1e-05
    %v923 = vrsqrt.pop %v921
    %v924 = vrsqrt.pop %v922
    %v925 = vmul.f32 %v909, %v923
    %v926 = vmul.f32 %v910, %v924
    %v927 = vlaneseq
    %v928 = vshrl.u32 %v927, 7
    %v929 = vsub.s32 4, %v928
    %v930 = vrot.slane %v97, %v929
    %v931 = vmul.f32 %v925, %v930
    %v932 = vmul.f32 %v926, %v930
    %v933 = vlaneseq
    %v934 = vshrl.u32 %v933, 7
    %v935 = vsub.s32 5, %v934
    %v936 = vrot.slane %v97, %v935
    %v937 = vadd.f32 %v931, %v936
    %v938 = vadd.f32 %v932, %v936
    %v939 = vpack.c.bf16 %v938, %v937
    %v940 = vlaneseq
    %v941 = vshrl.u32 %v940, 7
    %v942 = vsub.s32 2, %v941
    %v943 = vrot.slane %v97, %v942
    %v948 = vunpack.c.l.b16 %v65
    %v949 = vunpack.c.l.b16 %v66
    %v950 = vunpack.c.l.b16 %v67
    %v951 = vunpack.c.l.b16 %v68
    %v952 = vpack.c.b16 %v949, %v948
    %v953 = vpack.c.b16 %v951, %v950
    %v957 = vsel %vm164, %v939, 0
    %959 = vmatprep.subr.bf16.mxu0 0
    %960 = vmatpush1.bf16.msra.mxu0 0
    %961 = vmatprep.subr.bf16.mxu0 0
    %962 = vmatpush1.bf16.msra.mxu0 0
    %963 = vmatprep.subr.bf16.mxu0 0
    %964 = vmatpush1.bf16.msra.mxu0 0
    %965 = vmatprep.subr.bf16.mxu0 0
    %966 = vmatpush1.bf16.msra.mxu0 0
    %967 = vmatprep.subr.bf16.mxu0 0
    %968 = vmatpush1.bf16.msra.mxu0 0
    %969 = vmatprep.subr.bf16.mxu0 0
    %970 = vmatpush1.bf16.msra.mxu0 0
    %971 = vmatprep.subr.bf16.mxu0 0
    %972 = vmatpush1.bf16.msra.mxu0 %v953
    %973 = vmatprep.subr.bf16.mxu0 0
    %974 = vmatpush1.bf16.msra.mxu0 %v952
    %975 = vmatprep.subr.bf16.mxu0 0
    %976 = vmatpush2.bf16.msra.mxu0 0
    %977 = vmatprep.subr.bf16.mxu0 0
    %978 = vmatpush2.bf16.msra.mxu0 0
    %979 = vmatprep.subr.bf16.mxu0 0
    %980 = vmatpush2.bf16.msra.mxu0 0
    %981 = vmatprep.subr.bf16.mxu0 0
    %982 = vmatpush2.bf16.msra.mxu0 0
    %983 = vmatprep.subr.bf16.mxu0 0
    %984 = vmatpush2.bf16.msra.mxu0 0
    %985 = vmatprep.subr.bf16.mxu0 0
    %986 = vmatpush2.bf16.msra.mxu0 0
    %987 = vmatprep.subr.bf16.mxu0 0
    %988 = vmatpush2.bf16.msra.mxu0 0
    %989 = vmatprep.subr.bf16.mxu0 0
    %990 = vmatpush2.bf16.msra.mxu0 0
    %991 = vmatprep.mubr.bf16.mxu0 0
    %992 = vmatmul.mubr.bf16.gmra.mxu0 %v957
    %v993 = vpop.f32.mrf.mxu0
    %v994 = vadd.f32 %v943, %v993
    %v995 = vpop.f32.mrf.mxu0
    %v996 = vpop.f32.mrf.mxu0
    %v997 = vadd.f32 %v943, %v996
    %v998 = vpop.f32.mrf.mxu0
    %999 = vdwg.mxu0
    %v1000 = vmax.f32 %v994, 0.0
    %v1001 = vmax.f32 %v997, 0.0
    %v1002 = vpack.c.bf16 %v1001, %v1000
    %v1003 = vlaneseq
    %v1004 = vshrl.u32 %v1003, 7
    %v1005 = vsub.s32 3, %v1004
    %v1006 = vrot.slane %v97, %v1005
    %v1015 = vunpack.c.l.b16 %v69
    %v1016 = vunpack.c.l.b16 %v70
    %v1017 = vunpack.c.l.b16 %v71
    %v1018 = vunpack.c.l.b16 %v72
    %v1019 = vunpack.c.l.b16 %v73
    %v1020 = vunpack.c.l.b16 %v74
    %v1021 = vunpack.c.l.b16 %v75
    %v1022 = vunpack.c.l.b16 %v76
    %v1023 = vpack.c.b16 %v1016, %v1015
    %v1024 = vpack.c.b16 %v1018, %v1017
    %v1025 = vpack.c.b16 %v1020, %v1019
    %v1026 = vpack.c.b16 %v1022, %v1021
    %vm1031 = vcmask 523264
    %v1033 = vsel %vm1031, %v1002, 0
    %1035 = vmatprep.subr.bf16.mxu0 0
    %1036 = vmatpush1.bf16.msra.mxu0 0
    %1037 = vmatprep.subr.bf16.mxu0 0
    %1038 = vmatpush1.bf16.msra.mxu0 0
    %1039 = vmatprep.subr.bf16.mxu0 0
    %1040 = vmatpush1.bf16.msra.mxu0 0
    %1041 = vmatprep.subr.bf16.mxu0 0
    %1042 = vmatpush1.bf16.msra.mxu0 0
    %1043 = vmatprep.subr.bf16.mxu0 0
    %1044 = vmatpush1.bf16.msra.mxu0 %v1026
    %1045 = vmatprep.subr.bf16.mxu0 0
    %1046 = vmatpush1.bf16.msra.mxu0 %v1025
    %1047 = vmatprep.subr.bf16.mxu0 0
    %1048 = vmatpush1.bf16.msra.mxu0 %v1024
    %1049 = vmatprep.subr.bf16.mxu0 0
    %1050 = vmatpush1.bf16.msra.mxu0 %v1023
    %1051 = vmatprep.subr.bf16.mxu0 0
    %1052 = vmatpush2.bf16.msra.mxu0 0
    %1053 = vmatprep.subr.bf16.mxu0 0
    %1054 = vmatpush2.bf16.msra.mxu0 0
    %1055 = vmatprep.subr.bf16.mxu0 0
    %1056 = vmatpush2.bf16.msra.mxu0 0
    %1057 = vmatprep.subr.bf16.mxu0 0
    %1058 = vmatpush2.bf16.msra.mxu0 0
    %1059 = vmatprep.subr.bf16.mxu0 0
    %1060 = vmatpush2.bf16.msra.mxu0 0
    %1061 = vmatprep.subr.bf16.mxu0 0
    %1062 = vmatpush2.bf16.msra.mxu0 0
    %1063 = vmatprep.subr.bf16.mxu0 0
    %1064 = vmatpush2.bf16.msra.mxu0 0
    %1065 = vmatprep.subr.bf16.mxu0 0
    %1066 = vmatpush2.bf16.msra.mxu0 0
    %1067 = vmatprep.mubr.bf16.mxu0 0
    %1068 = vmatmul.mubr.bf16.gmra.mxu0 %v1033
    %v1069 = vpop.f32.mrf.mxu0
    %v1070 = vadd.f32 %v1006, %v1069
    %v1071 = vpop.f32.mrf.mxu0
    %v1072 = vpop.f32.mrf.mxu0
    %v1073 = vadd.f32 %v1006, %v1072
    %v1074 = vpop.f32.mrf.mxu0
    %1075 = vdwg.mxu0
    %v1076 = vadd.f32 %v937, %v1070
    %v1077 = vadd.f32 %v938, %v1073
    %v1078 = vsel %vm164, %v1076, 0.0
    %1079 = vadd.xlane.f32.xlu0 %v1078
    %v1080 = vpop.xlane.xlu0 %1079
    %v1081 = vsel %vm164, %v1077, 0.0
    %1082 = vadd.xlane.f32.xlu0 %v1081
    %v1083 = vpop.xlane.xlu0 %1082
    %v1084 = vmul.f32 %v1080, %v906
    %v1085 = vmul.f32 %v1083, %v906
    %v1086 = vsub.f32 %v1076, %v1084
    %v1087 = vsub.f32 %v1077, %v1085
    %v1088 = vmul.f32 %v1086, %v1086
    %v1089 = vmul.f32 %v1087, %v1087
    %v1090 = vsel %vm164, %v1088, 0.0
    %1091 = vadd.xlane.f32.xlu0 %v1090
    %v1092 = vpop.xlane.xlu0 %1091
    %v1093 = vsel %vm164, %v1089, 0.0
    %1094 = vadd.xlane.f32.xlu0 %v1093
    %v1095 = vpop.xlane.xlu0 %1094
    %v1096 = vmul.f32 %v1092, %v906
    %v1097 = vmul.f32 %v1095, %v906
    %v1098 = vadd.f32 %v1096, 1e-05
    %v1099 = vadd.f32 %v1097, 1e-05
    %v1100 = vrsqrt.pop %v1098
    %v1101 = vrsqrt.pop %v1099
    %v1102 = vmul.f32 %v1086, %v1100
    %v1103 = vmul.f32 %v1087, %v1101
    %v1104 = vlaneseq
    %v1105 = vshrl.u32 %v1104, 7
    %v1106 = vsub.s32 6, %v1105
    %v1107 = vrot.slane %v97, %v1106
    %v1108 = vmul.f32 %v1102, %v1107
    %v1109 = vmul.f32 %v1103, %v1107
    %v1110 = vlaneseq
    %v1111 = vshrl.u32 %v1110, 7
    %v1112 = vsub.s32 7, %v1111
    %v1113 = vrot.slane %v97, %v1112
    %v1114 = vadd.f32 %v1108, %v1113
    %v1115 = vadd.f32 %v1109, %v1113
    %v1116 = vpack.c.bf16 %v1115, %v1114
    %v1117 = vlaneseq
    %v1118 = vshrl.u32 %v1117, 7
    %v1119 = vsub.s32 0, %v1118
    %v1120 = vrot.slane %v98, %v1119
    %v1125 = vunpack.c.l.b16 %v77
    %v1126 = vunpack.c.l.b16 %v78
    %v1127 = vunpack.c.l.b16 %v79
    %v1128 = vunpack.c.l.b16 %v80
    %v1129 = vpack.c.b16 %v1126, %v1125
    %v1130 = vpack.c.b16 %v1128, %v1127
    %v1134 = vsel %vm164, %v1116, 0
    %1136 = vmatprep.subr.bf16.mxu0 0
    %1137 = vmatpush1.bf16.msra.mxu0 0
    %1138 = vmatprep.subr.bf16.mxu0 0
    %1139 = vmatpush1.bf16.msra.mxu0 0
    %1140 = vmatprep.subr.bf16.mxu0 0
    %1141 = vmatpush1.bf16.msra.mxu0 0
    %1142 = vmatprep.subr.bf16.mxu0 0
    %1143 = vmatpush1.bf16.msra.mxu0 0
    %1144 = vmatprep.subr.bf16.mxu0 0
    %1145 = vmatpush1.bf16.msra.mxu0 0
    %1146 = vmatprep.subr.bf16.mxu0 0
    %1147 = vmatpush1.bf16.msra.mxu0 0
    %1148 = vmatprep.subr.bf16.mxu0 0
    %1149 = vmatpush1.bf16.msra.mxu0 %v1130
    %1150 = vmatprep.subr.bf16.mxu0 0
    %1151 = vmatpush1.bf16.msra.mxu0 %v1129
    %1152 = vmatprep.subr.bf16.mxu0 0
    %1153 = vmatpush2.bf16.msra.mxu0 0
    %1154 = vmatprep.subr.bf16.mxu0 0
    %1155 = vmatpush2.bf16.msra.mxu0 0
    %1156 = vmatprep.subr.bf16.mxu0 0
    %1157 = vmatpush2.bf16.msra.mxu0 0
    %1158 = vmatprep.subr.bf16.mxu0 0
    %1159 = vmatpush2.bf16.msra.mxu0 0
    %1160 = vmatprep.subr.bf16.mxu0 0
    %1161 = vmatpush2.bf16.msra.mxu0 0
    %1162 = vmatprep.subr.bf16.mxu0 0
    %1163 = vmatpush2.bf16.msra.mxu0 0
    %1164 = vmatprep.subr.bf16.mxu0 0
    %1165 = vmatpush2.bf16.msra.mxu0 0
    %1166 = vmatprep.subr.bf16.mxu0 0
    %1167 = vmatpush2.bf16.msra.mxu0 0
    %1168 = vmatprep.mubr.bf16.mxu0 0
    %1169 = vmatmul.mubr.bf16.gmra.mxu0 %v1134
    %v1170 = vpop.f32.mrf.mxu0
    %v1171 = vadd.f32 %v1120, %v1170
    %v1172 = vpop.f32.mrf.mxu0
    %v1173 = vpop.f32.mrf.mxu0
    %v1174 = vadd.f32 %v1120, %v1173
    %v1175 = vpop.f32.mrf.mxu0
    %1176 = vdwg.mxu0
    %v1177 = vpack.c.bf16 %v1174, %v1171
    %1179 = vrot.lane.b32.xlu0 %v1177, 96
    %v1180 = vpop.permute.xlu0 %1179
    %v1182 = vsel %vm213, %v1177, 0
    %v1185 = vsel %vm213, %v1180, 0
    %1187 = vmatprep.subr.bf16.mxu0 0
    %1188 = vmatpush1.bf16.xpose.msra.mxu0 0
    %1189 = vmatprep.subr.bf16.mxu0 0
    %1190 = vmatpush1.bf16.xpose.msra.mxu0 0
    %1191 = vmatprep.subr.bf16.mxu0 0
    %1192 = vmatpush1.bf16.xpose.msra.mxu0 0
    %1193 = vmatprep.subr.bf16.mxu0 0
    %1194 = vmatpush1.bf16.xpose.msra.mxu0 0
    %1195 = vmatprep.subr.bf16.mxu0 0
    %1196 = vmatpush1.bf16.xpose.msra.mxu0 0
    %1197 = vmatprep.subr.bf16.mxu0 0
    %1198 = vmatpush1.bf16.xpose.msra.mxu0 0
    %1199 = vmatprep.subr.bf16.mxu0 0
    %1200 = vmatpush1.bf16.xpose.msra.mxu0 0
    %1201 = vmatprep.subr.bf16.mxu0 0
    %1202 = vmatpush1.bf16.xpose.msra.mxu0 %v1185
    %1203 = vmatprep.subr.bf16.mxu0 0
    %1204 = vmatpush2.bf16.xpose.msra.mxu0 0
    %1205 = vmatprep.subr.bf16.mxu0 0
    %1206 = vmatpush2.bf16.xpose.msra.mxu0 0
    %1207 = vmatprep.subr.bf16.mxu0 0
    %1208 = vmatpush2.bf16.xpose.msra.mxu0 0
    %1209 = vmatprep.subr.bf16.mxu0 0
    %1210 = vmatpush2.bf16.xpose.msra.mxu0 0
    %1211 = vmatprep.subr.bf16.mxu0 0
    %1212 = vmatpush2.bf16.xpose.msra.mxu0 0
    %1213 = vmatprep.subr.bf16.mxu0 0
    %1214 = vmatpush2.bf16.xpose.msra.mxu0 0
    %1215 = vmatprep.subr.bf16.mxu0 0
    %1216 = vmatpush2.bf16.xpose.msra.mxu0 0
    %1217 = vmatprep.subr.bf16.mxu0 0
    %1218 = vmatpush2.bf16.xpose.msra.mxu0 0
    %1219 = vmatprep.mubr.bf16.mxu0 0
    %1220 = vmatmul.mubr.bf16.gmra.mxu0 %v1182
    %v1221 = vpop.f32.mrf.mxu0
    %v1222 = vadd.f32 %v145, %v1221
    %v1223 = vpop.f32.mrf.mxu0
    %v1224 = vpop.f32.mrf.mxu0
    %v1225 = vadd.f32 %v146, %v1224
    %v1226 = vpop.f32.mrf.mxu0
    %1227 = vdwg.mxu0
    %v1228 = vsel %vm261, %v1222, -inf
    %1229 = vmax.xlane.f32.xlu0 %v1228
    %v1230 = vpop.xlane.xlu0 %1229
    %v1231 = vsel %vm261, %v1225, -inf
    %1232 = vmax.xlane.f32.xlu0 %v1231
    %v1233 = vpop.xlane.xlu0 %1232
    %v1234 = vsub.f32 %v1222, %v1230
    %v1235 = vsub.f32 %v1225, %v1233
    %v1236 = vmul.f32 %v1234, 1.442695
    %v1237 = vpow.pop %v1236
    %v1238 = vmul.f32 %v1235, 1.442695
    %v1239 = vpow.pop %v1238
    %v1240 = vsel %vm261, %v1237, 0.0
    %1241 = vadd.xlane.f32.xlu0 %v1240
    %v1242 = vpop.xlane.xlu0 %1241
    %v1243 = vsel %vm261, %v1239, 0.0
    %1244 = vadd.xlane.f32.xlu0 %v1243
    %v1245 = vpop.xlane.xlu0 %1244
    %v1246 = vrcp.pop %v1242
    %v1247 = vmul.f32 %v1237, %v1246
    %v1248 = vrcp.pop %v1245
    %v1249 = vmul.f32 %v1239, %v1248
    %v1250 = vpack.c.bf16 %v1249, %v1247
    %1251 = vrot.lane.b32.xlu0 %v1177, 64
    %v1252 = vpop.permute.xlu0 %1251
    %v1255 = vsel %vm261, %v1250, 0
    %1257 = vmatprep.subr.bf16.mxu0 0
    %1258 = vmatpush1.bf16.msra.mxu0 0
    %1259 = vmatprep.subr.bf16.mxu0 0
    %1260 = vmatpush1.bf16.msra.mxu0 0
    %1261 = vmatprep.subr.bf16.mxu0 0
    %1262 = vmatpush1.bf16.msra.mxu0 0
    %1263 = vmatprep.subr.bf16.mxu0 0
    %1264 = vmatpush1.bf16.msra.mxu0 0
    %1265 = vmatprep.subr.bf16.mxu0 0
    %1266 = vmatpush1.bf16.msra.mxu0 0
    %1267 = vmatprep.subr.bf16.mxu0 0
    %1268 = vmatpush1.bf16.msra.mxu0 0
    %1269 = vmatprep.subr.bf16.mxu0 0
    %1270 = vmatpush1.bf16.msra.mxu0 0
    %1271 = vmatprep.subr.bf16.mxu0 0
    %1272 = vmatpush1.bf16.msra.mxu0 %v1252
    %1273 = vmatprep.subr.bf16.mxu0 0
    %1274 = vmatpush2.bf16.msra.mxu0 0
    %1275 = vmatprep.subr.bf16.mxu0 0
    %1276 = vmatpush2.bf16.msra.mxu0 0
    %1277 = vmatprep.subr.bf16.mxu0 0
    %1278 = vmatpush2.bf16.msra.mxu0 0
    %1279 = vmatprep.subr.bf16.mxu0 0
    %1280 = vmatpush2.bf16.msra.mxu0 0
    %1281 = vmatprep.subr.bf16.mxu0 0
    %1282 = vmatpush2.bf16.msra.mxu0 0
    %1283 = vmatprep.subr.bf16.mxu0 0
    %1284 = vmatpush2.bf16.msra.mxu0 0
    %1285 = vmatprep.subr.bf16.mxu0 0
    %1286 = vmatpush2.bf16.msra.mxu0 0
    %1287 = vmatprep.subr.bf16.mxu0 0
    %1288 = vmatpush2.bf16.msra.mxu0 0
    %1289 = vmatprep.mubr.bf16.mxu0 0
    %1290 = vmatmul.mubr.bf16.gmra.mxu0 %v1255
    %v1291 = vpop.f32.mrf.mxu0
    %v1292 = vadd.f32 0.0, %v1291
    %v1293 = vpop.f32.mrf.mxu0
    %v1294 = vpop.f32.mrf.mxu0
    %v1295 = vadd.f32 0.0, %v1294
    %v1296 = vpop.f32.mrf.mxu0
    %1297 = vdwg.mxu0
    %v1298 = vpack.c.bf16 %v1295, %v1292
    %1299 = vrot.lane.b32.xlu0 %v1177, 120
    %v1300 = vpop.permute.xlu0 %1299
    %1301 = vrot.lane.b32.xlu0 %v1177, 88
    %v1302 = vpop.permute.xlu0 %1301
    %v1304 = vsel %vm213, %v1300, 0
    %v1307 = vsel %vm213, %v1302, 0
    %1309 = vmatprep.subr.bf16.mxu0 0
    %1310 = vmatpush1.bf16.xpose.msra.mxu0 0
    %1311 = vmatprep.subr.bf16.mxu0 0
    %1312 = vmatpush1.bf16.xpose.msra.mxu0 0
    %1313 = vmatprep.subr.bf16.mxu0 0
    %1314 = vmatpush1.bf16.xpose.msra.mxu0 0
    %1315 = vmatprep.subr.bf16.mxu0 0
    %1316 = vmatpush1.bf16.xpose.msra.mxu0 0
    %1317 = vmatprep.subr.bf16.mxu0 0
    %1318 = vmatpush1.bf16.xpose.msra.mxu0 0
    %1319 = vmatprep.subr.bf16.mxu0 0
    %1320 = vmatpush1.bf16.xpose.msra.mxu0 0
    %1321 = vmatprep.subr.bf16.mxu0 0
    %1322 = vmatpush1.bf16.xpose.msra.mxu0 0
    %1323 = vmatprep.subr.bf16.mxu0 0
    %1324 = vmatpush1.bf16.xpose.msra.mxu0 %v1307
    %1325 = vmatprep.subr.bf16.mxu0 0
    %1326 = vmatpush2.bf16.xpose.msra.mxu0 0
    %1327 = vmatprep.subr.bf16.mxu0 0
    %1328 = vmatpush2.bf16.xpose.msra.mxu0 0
    %1329 = vmatprep.subr.bf16.mxu0 0
    %1330 = vmatpush2.bf16.xpose.msra.mxu0 0
    %1331 = vmatprep.subr.bf16.mxu0 0
    %1332 = vmatpush2.bf16.xpose.msra.mxu0 0
    %1333 = vmatprep.subr.bf16.mxu0 0
    %1334 = vmatpush2.bf16.xpose.msra.mxu0 0
    %1335 = vmatprep.subr.bf16.mxu0 0
    %1336 = vmatpush2.bf16.xpose.msra.mxu0 0
    %1337 = vmatprep.subr.bf16.mxu0 0
    %1338 = vmatpush2.bf16.xpose.msra.mxu0 0
    %1339 = vmatprep.subr.bf16.mxu0 0
    %1340 = vmatpush2.bf16.xpose.msra.mxu0 0
    %1341 = vmatprep.mubr.bf16.mxu0 0
    %1342 = vmatmul.mubr.bf16.gmra.mxu0 %v1304
    %v1343 = vpop.f32.mrf.mxu0
    %v1344 = vadd.f32 %v145, %v1343
    %v1345 = vpop.f32.mrf.mxu0
    %v1346 = vpop.f32.mrf.mxu0
    %v1347 = vadd.f32 %v146, %v1346
    %v1348 = vpop.f32.mrf.mxu0
    %1349 = vdwg.mxu0
    %v1350 = vsel %vm261, %v1344, -inf
    %1351 = vmax.xlane.f32.xlu0 %v1350
    %v1352 = vpop.xlane.xlu0 %1351
    %v1353 = vsel %vm261, %v1347, -inf
    %1354 = vmax.xlane.f32.xlu0 %v1353
    %v1355 = vpop.xlane.xlu0 %1354
    %v1356 = vsub.f32 %v1344, %v1352
    %v1357 = vsub.f32 %v1347, %v1355
    %v1358 = vmul.f32 %v1356, 1.442695
    %v1359 = vpow.pop %v1358
    %v1360 = vmul.f32 %v1357, 1.442695
    %v1361 = vpow.pop %v1360
    %v1362 = vsel %vm261, %v1359, 0.0
    %1363 = vadd.xlane.f32.xlu0 %v1362
    %v1364 = vpop.xlane.xlu0 %1363
    %v1365 = vsel %vm261, %v1361, 0.0
    %1366 = vadd.xlane.f32.xlu0 %v1365
    %v1367 = vpop.xlane.xlu0 %1366
    %v1368 = vrcp.pop %v1364
    %v1369 = vmul.f32 %v1359, %v1368
    %v1370 = vrcp.pop %v1367
    %v1371 = vmul.f32 %v1361, %v1370
    %v1372 = vpack.c.bf16 %v1371, %v1369
    %1373 = vrot.lane.b32.xlu0 %v1177, 56
    %v1374 = vpop.permute.xlu0 %1373
    %v1377 = vsel %vm261, %v1372, 0
    %1379 = vmatprep.subr.bf16.mxu0 0
    %1380 = vmatpush1.bf16.msra.mxu0 0
    %1381 = vmatprep.subr.bf16.mxu0 0
    %1382 = vmatpush1.bf16.msra.mxu0 0
    %1383 = vmatprep.subr.bf16.mxu0 0
    %1384 = vmatpush1.bf16.msra.mxu0 0
    %1385 = vmatprep.subr.bf16.mxu0 0
    %1386 = vmatpush1.bf16.msra.mxu0 0
    %1387 = vmatprep.subr.bf16.mxu0 0
    %1388 = vmatpush1.bf16.msra.mxu0 0
    %1389 = vmatprep.subr.bf16.mxu0 0
    %1390 = vmatpush1.bf16.msra.mxu0 0
    %1391 = vmatprep.subr.bf16.mxu0 0
    %1392 = vmatpush1.bf16.msra.mxu0 0
    %1393 = vmatprep.subr.bf16.mxu0 0
    %1394 = vmatpush1.bf16.msra.mxu0 %v1374
    %1395 = vmatprep.subr.bf16.mxu0 0
    %1396 = vmatpush2.bf16.msra.mxu0 0
    %1397 = vmatprep.subr.bf16.mxu0 0
    %1398 = vmatpush2.bf16.msra.mxu0 0
    %1399 = vmatprep.subr.bf16.mxu0 0
    %1400 = vmatpush2.bf16.msra.mxu0 0
    %1401 = vmatprep.subr.bf16.mxu0 0
    %1402 = vmatpush2.bf16.msra.mxu0 0
    %1403 = vmatprep.subr.bf16.mxu0 0
    %1404 = vmatpush2.bf16.msra.mxu0 0
    %1405 = vmatprep.subr.bf16.mxu0 0
    %1406 = vmatpush2.bf16.msra.mxu0 0
    %1407 = vmatprep.subr.bf16.mxu0 0
    %1408 = vmatpush2.bf16.msra.mxu0 0
    %1409 = vmatprep.subr.bf16.mxu0 0
    %1410 = vmatpush2.bf16.msra.mxu0 0
    %1411 = vmatprep.mubr.bf16.mxu0 0
    %1412 = vmatmul.mubr.bf16.gmra.mxu0 %v1377
    %v1413 = vpop.f32.mrf.mxu0
    %v1414 = vadd.f32 0.0, %v1413
    %v1415 = vpop.f32.mrf.mxu0
    %v1416 = vpop.f32.mrf.mxu0
    %v1417 = vadd.f32 0.0, %v1416
    %v1418 = vpop.f32.mrf.mxu0
    %1419 = vdwg.mxu0
    %v1420 = vpack.c.bf16 %v1417, %v1414
    %v1422 = vsel %vm213, %v1420, 0
    %v1425 = vsel %vm458, %v82, 0
    %1427 = vmatprep.subr.bf16.mxu0 0
    %1428 = vmatpush1.bf16.msra.mxu0 0
    %1429 = vmatprep.subr.bf16.mxu0 0
    %1430 = vmatpush1.bf16.msra.mxu0 0
    %1431 = vmatprep.subr.bf16.mxu0 0
    %1432 = vmatpush1.bf16.msra.mxu0 0
    %1433 = vmatprep.subr.bf16.mxu0 0
    %1434 = vmatpush1.bf16.msra.mxu0 0
    %1435 = vmatprep.subr.bf16.mxu0 0
    %1436 = vmatpush1.bf16.msra.mxu0 0
    %1437 = vmatprep.subr.bf16.mxu0 0
    %1438 = vmatpush1.bf16.msra.mxu0 0
    %1439 = vmatprep.subr.bf16.mxu0 0
    %1440 = vmatpush1.bf16.msra.mxu0 0
    %1441 = vmatprep.subr.bf16.mxu0 0
    %1442 = vmatpush1.bf16.msra.mxu0 %v1425
    %1443 = vmatprep.subr.bf16.mxu0 0
    %1444 = vmatpush2.bf16.msra.mxu0 0
    %1445 = vmatprep.subr.bf16.mxu0 0
    %1446 = vmatpush2.bf16.msra.mxu0 0
    %1447 = vmatprep.subr.bf16.mxu0 0
    %1448 = vmatpush2.bf16.msra.mxu0 0
    %1449 = vmatprep.subr.bf16.mxu0 0
    %1450 = vmatpush2.bf16.msra.mxu0 0
    %1451 = vmatprep.subr.bf16.mxu0 0
    %1452 = vmatpush2.bf16.msra.mxu0 0
    %1453 = vmatprep.subr.bf16.mxu0 0
    %1454 = vmatpush2.bf16.msra.mxu0 0
    %1455 = vmatprep.subr.bf16.mxu0 0
    %1456 = vmatpush2.bf16.msra.mxu0 0
    %1457 = vmatprep.subr.bf16.mxu0 0
    %1458 = vmatpush2.bf16.msra.mxu0 0
    %1459 = vmatprep.mubr.bf16.mxu0 0
    %1460 = vmatmul.mubr.bf16.gmra.mxu0 %v1422
    %v1461 = vpop.f32.mrf.mxu0
    %v1462 = vadd.f32 0.0, %v1461
    %v1463 = vpop.f32.mrf.mxu0
    %v1464 = vpop.f32.mrf.mxu0
    %v1465 = vadd.f32 0.0, %v1464
    %v1466 = vpop.f32.mrf.mxu0
    %1467 = vdwg.mxu0
    %v1469 = vsel %vm213, %v1298, 0
    %v1472 = vsel %vm458, %v81, 0
    %1474 = vmatprep.subr.bf16.mxu0 0
    %1475 = vmatpush1.bf16.msra.mxu0 0
    %1476 = vmatprep.subr.bf16.mxu0 0
    %1477 = vmatpush1.bf16.msra.mxu0 0
    %1478 = vmatprep.subr.bf16.mxu0 0
    %1479 = vmatpush1.bf16.msra.mxu0 0
    %1480 = vmatprep.subr.bf16.mxu0 0
    %1481 = vmatpush1.bf16.msra.mxu0 0
    %1482 = vmatprep.subr.bf16.mxu0 0
    %1483 = vmatpush1.bf16.msra.mxu0 0
    %1484 = vmatprep.subr.bf16.mxu0 0
    %1485 = vmatpush1.bf16.msra.mxu0 0
    %1486 = vmatprep.subr.bf16.mxu0 0
    %1487 = vmatpush1.bf16.msra.mxu0 0
    %1488 = vmatprep.subr.bf16.mxu0 0
    %1489 = vmatpush1.bf16.msra.mxu0 %v1472
    %1490 = vmatprep.subr.bf16.mxu0 0
    %1491 = vmatpush2.bf16.msra.mxu0 0
    %1492 = vmatprep.subr.bf16.mxu0 0
    %1493 = vmatpush2.bf16.msra.mxu0 0
    %1494 = vmatprep.subr.bf16.mxu0 0
    %1495 = vmatpush2.bf16.msra.mxu0 0
    %1496 = vmatprep.subr.bf16.mxu0 0
    %1497 = vmatpush2.bf16.msra.mxu0 0
    %1498 = vmatprep.subr.bf16.mxu0 0
    %1499 = vmatpush2.bf16.msra.mxu0 0
    %1500 = vmatprep.subr.bf16.mxu0 0
    %1501 = vmatpush2.bf16.msra.mxu0 0
    %1502 = vmatprep.subr.bf16.mxu0 0
    %1503 = vmatpush2.bf16.msra.mxu0 0
    %1504 = vmatprep.subr.bf16.mxu0 0
    %1505 = vmatpush2.bf16.msra.mxu0 0
    %1506 = vmatprep.mubr.bf16.mxu0 0
    %1507 = vmatmul.mubr.bf16.gmra.mxu0 %v1469
    %v1508 = vpop.f32.mrf.mxu0
    %v1509 = vadd.f32 %v1462, %v1508
    %v1510 = vpop.f32.mrf.mxu0
    %v1511 = vpop.f32.mrf.mxu0
    %v1512 = vadd.f32 %v1465, %v1511
    %v1513 = vpop.f32.mrf.mxu0
    %1514 = vdwg.mxu0
    %1515 = vrot.lane.b32.xlu0 %v1177, 112
    %v1516 = vpop.permute.xlu0 %1515
    %1517 = vrot.lane.b32.xlu0 %v1177, 80
    %v1518 = vpop.permute.xlu0 %1517
    %v1520 = vsel %vm213, %v1516, 0
    %v1523 = vsel %vm213, %v1518, 0
    %1525 = vmatprep.subr.bf16.mxu0 0
    %1526 = vmatpush1.bf16.xpose.msra.mxu0 0
    %1527 = vmatprep.subr.bf16.mxu0 0
    %1528 = vmatpush1.bf16.xpose.msra.mxu0 0
    %1529 = vmatprep.subr.bf16.mxu0 0
    %1530 = vmatpush1.bf16.xpose.msra.mxu0 0
    %1531 = vmatprep.subr.bf16.mxu0 0
    %1532 = vmatpush1.bf16.xpose.msra.mxu0 0
    %1533 = vmatprep.subr.bf16.mxu0 0
    %1534 = vmatpush1.bf16.xpose.msra.mxu0 0
    %1535 = vmatprep.subr.bf16.mxu0 0
    %1536 = vmatpush1.bf16.xpose.msra.mxu0 0
    %1537 = vmatprep.subr.bf16.mxu0 0
    %1538 = vmatpush1.bf16.xpose.msra.mxu0 0
    %1539 = vmatprep.subr.bf16.mxu0 0
    %1540 = vmatpush1.bf16.xpose.msra.mxu0 %v1523
    %1541 = vmatprep.subr.bf16.mxu0 0
    %1542 = vmatpush2.bf16.xpose.msra.mxu0 0
    %1543 = vmatprep.subr.bf16.mxu0 0
    %1544 = vmatpush2.bf16.xpose.msra.mxu0 0
    %1545 = vmatprep.subr.bf16.mxu0 0
    %1546 = vmatpush2.bf16.xpose.msra.mxu0 0
    %1547 = vmatprep.subr.bf16.mxu0 0
    %1548 = vmatpush2.bf16.xpose.msra.mxu0 0
    %1549 = vmatprep.subr.bf16.mxu0 0
    %1550 = vmatpush2.bf16.xpose.msra.mxu0 0
    %1551 = vmatprep.subr.bf16.mxu0 0
    %1552 = vmatpush2.bf16.xpose.msra.mxu0 0
    %1553 = vmatprep.subr.bf16.mxu0 0
    %1554 = vmatpush2.bf16.xpose.msra.mxu0 0
    %1555 = vmatprep.subr.bf16.mxu0 0
    %1556 = vmatpush2.bf16.xpose.msra.mxu0 0
    %1557 = vmatprep.mubr.bf16.mxu0 0
    %1558 = vmatmul.mubr.bf16.gmra.mxu0 %v1520
    %v1559 = vpop.f32.mrf.mxu0
    %v1560 = vadd.f32 %v145, %v1559
    %v1561 = vpop.f32.mrf.mxu0
    %v1562 = vpop.f32.mrf.mxu0
    %v1563 = vadd.f32 %v146, %v1562
    %v1564 = vpop.f32.mrf.mxu0
    %1565 = vdwg.mxu0
    %v1566 = vsel %vm261, %v1560, -inf
    %1567 = vmax.xlane.f32.xlu0 %v1566
    %v1568 = vpop.xlane.xlu0 %1567
    %v1569 = vsel %vm261, %v1563, -inf
    %1570 = vmax.xlane.f32.xlu0 %v1569
    %v1571 = vpop.xlane.xlu0 %1570
    %v1572 = vsub.f32 %v1560, %v1568
    %v1573 = vsub.f32 %v1563, %v1571
    %v1574 = vmul.f32 %v1572, 1.442695
    %v1575 = vpow.pop %v1574
    %v1576 = vmul.f32 %v1573, 1.442695
    %v1577 = vpow.pop %v1576
    %v1578 = vsel %vm261, %v1575, 0.0
    %1579 = vadd.xlane.f32.xlu0 %v1578
    %v1580 = vpop.xlane.xlu0 %1579
    %v1581 = vsel %vm261, %v1577, 0.0
    %1582 = vadd.xlane.f32.xlu0 %v1581
    %v1583 = vpop.xlane.xlu0 %1582
    %v1584 = vrcp.pop %v1580
    %v1585 = vmul.f32 %v1575, %v1584
    %v1586 = vrcp.pop %v1583
    %v1587 = vmul.f32 %v1577, %v1586
    %v1588 = vpack.c.bf16 %v1587, %v1585
    %1589 = vrot.lane.b32.xlu0 %v1177, 48
    %v1590 = vpop.permute.xlu0 %1589
    %v1593 = vsel %vm261, %v1588, 0
    %1595 = vmatprep.subr.bf16.mxu0 0
    %1596 = vmatpush1.bf16.msra.mxu0 0
    %1597 = vmatprep.subr.bf16.mxu0 0
    %1598 = vmatpush1.bf16.msra.mxu0 0
    %1599 = vmatprep.subr.bf16.mxu0 0
    %1600 = vmatpush1.bf16.msra.mxu0 0
    %1601 = vmatprep.subr.bf16.mxu0 0
    %1602 = vmatpush1.bf16.msra.mxu0 0
    %1603 = vmatprep.subr.bf16.mxu0 0
    %1604 = vmatpush1.bf16.msra.mxu0 0
    %1605 = vmatprep.subr.bf16.mxu0 0
    %1606 = vmatpush1.bf16.msra.mxu0 0
    %1607 = vmatprep.subr.bf16.mxu0 0
    %1608 = vmatpush1.bf16.msra.mxu0 0
    %1609 = vmatprep.subr.bf16.mxu0 0
    %1610 = vmatpush1.bf16.msra.mxu0 %v1590
    %1611 = vmatprep.subr.bf16.mxu0 0
    %1612 = vmatpush2.bf16.msra.mxu0 0
    %1613 = vmatprep.subr.bf16.mxu0 0
    %1614 = vmatpush2.bf16.msra.mxu0 0
    %1615 = vmatprep.subr.bf16.mxu0 0
    %1616 = vmatpush2.bf16.msra.mxu0 0
    %1617 = vmatprep.subr.bf16.mxu0 0
    %1618 = vmatpush2.bf16.msra.mxu0 0
    %1619 = vmatprep.subr.bf16.mxu0 0
    %1620 = vmatpush2.bf16.msra.mxu0 0
    %1621 = vmatprep.subr.bf16.mxu0 0
    %1622 = vmatpush2.bf16.msra.mxu0 0
    %1623 = vmatprep.subr.bf16.mxu0 0
    %1624 = vmatpush2.bf16.msra.mxu0 0
    %1625 = vmatprep.subr.bf16.mxu0 0
    %1626 = vmatpush2.bf16.msra.mxu0 0
    %1627 = vmatprep.mubr.bf16.mxu0 0
    %1628 = vmatmul.mubr.bf16.gmra.mxu0 %v1593
    %v1629 = vpop.f32.mrf.mxu0
    %v1630 = vadd.f32 0.0, %v1629
    %v1631 = vpop.f32.mrf.mxu0
    %v1632 = vpop.f32.mrf.mxu0
    %v1633 = vadd.f32 0.0, %v1632
    %v1634 = vpop.f32.mrf.mxu0
    %1635 = vdwg.mxu0
    %v1636 = vpack.c.bf16 %v1633, %v1630
    %v1638 = vsel %vm213, %v1636, 0
    %v1641 = vsel %vm458, %v83, 0
    %1643 = vmatprep.subr.bf16.mxu0 0
    %1644 = vmatpush1.bf16.msra.mxu0 0
    %1645 = vmatprep.subr.bf16.mxu0 0
    %1646 = vmatpush1.bf16.msra.mxu0 0
    %1647 = vmatprep.subr.bf16.mxu0 0
    %1648 = vmatpush1.bf16.msra.mxu0 0
    %1649 = vmatprep.subr.bf16.mxu0 0
    %1650 = vmatpush1.bf16.msra.mxu0 0
    %1651 = vmatprep.subr.bf16.mxu0 0
    %1652 = vmatpush1.bf16.msra.mxu0 0
    %1653 = vmatprep.subr.bf16.mxu0 0
    %1654 = vmatpush1.bf16.msra.mxu0 0
    %1655 = vmatprep.subr.bf16.mxu0 0
    %1656 = vmatpush1.bf16.msra.mxu0 0
    %1657 = vmatprep.subr.bf16.mxu0 0
    %1658 = vmatpush1.bf16.msra.mxu0 %v1641
    %1659 = vmatprep.subr.bf16.mxu0 0
    %1660 = vmatpush2.bf16.msra.mxu0 0
    %1661 = vmatprep.subr.bf16.mxu0 0
    %1662 = vmatpush2.bf16.msra.mxu0 0
    %1663 = vmatprep.subr.bf16.mxu0 0
    %1664 = vmatpush2.bf16.msra.mxu0 0
    %1665 = vmatprep.subr.bf16.mxu0 0
    %1666 = vmatpush2.bf16.msra.mxu0 0
    %1667 = vmatprep.subr.bf16.mxu0 0
    %1668 = vmatpush2.bf16.msra.mxu0 0
    %1669 = vmatprep.subr.bf16.mxu0 0
    %1670 = vmatpush2.bf16.msra.mxu0 0
    %1671 = vmatprep.subr.bf16.mxu0 0
    %1672 = vmatpush2.bf16.msra.mxu0 0
    %1673 = vmatprep.subr.bf16.mxu0 0
    %1674 = vmatpush2.bf16.msra.mxu0 0
    %1675 = vmatprep.mubr.bf16.mxu0 0
    %1676 = vmatmul.mubr.bf16.gmra.mxu0 %v1638
    %v1677 = vpop.f32.mrf.mxu0
    %v1678 = vadd.f32 0.0, %v1677
    %v1679 = vpop.f32.mrf.mxu0
    %v1680 = vpop.f32.mrf.mxu0
    %v1681 = vadd.f32 0.0, %v1680
    %v1682 = vpop.f32.mrf.mxu0
    %1683 = vdwg.mxu0
    %v1684 = vadd.f32 %v1509, %v1678
    %v1685 = vadd.f32 %v1512, %v1681
    %1686 = vrot.lane.b32.xlu0 %v1177, 104
    %v1687 = vpop.permute.xlu0 %1686
    %1688 = vrot.lane.b32.xlu0 %v1177, 72
    %v1689 = vpop.permute.xlu0 %1688
    %v1691 = vsel %vm213, %v1687, 0
    %v1694 = vsel %vm213, %v1689, 0
    %1696 = vmatprep.subr.bf16.mxu0 0
    %1697 = vmatpush1.bf16.xpose.msra.mxu0 0
    %1698 = vmatprep.subr.bf16.mxu0 0
    %1699 = vmatpush1.bf16.xpose.msra.mxu0 0
    %1700 = vmatprep.subr.bf16.mxu0 0
    %1701 = vmatpush1.bf16.xpose.msra.mxu0 0
    %1702 = vmatprep.subr.bf16.mxu0 0
    %1703 = vmatpush1.bf16.xpose.msra.mxu0 0
    %1704 = vmatprep.subr.bf16.mxu0 0
    %1705 = vmatpush1.bf16.xpose.msra.mxu0 0
    %1706 = vmatprep.subr.bf16.mxu0 0
    %1707 = vmatpush1.bf16.xpose.msra.mxu0 0
    %1708 = vmatprep.subr.bf16.mxu0 0
    %1709 = vmatpush1.bf16.xpose.msra.mxu0 0
    %1710 = vmatprep.subr.bf16.mxu0 0
    %1711 = vmatpush1.bf16.xpose.msra.mxu0 %v1694
    %1712 = vmatprep.subr.bf16.mxu0 0
    %1713 = vmatpush2.bf16.xpose.msra.mxu0 0
    %1714 = vmatprep.subr.bf16.mxu0 0
    %1715 = vmatpush2.bf16.xpose.msra.mxu0 0
    %1716 = vmatprep.subr.bf16.mxu0 0
    %1717 = vmatpush2.bf16.xpose.msra.mxu0 0
    %1718 = vmatprep.subr.bf16.mxu0 0
    %1719 = vmatpush2.bf16.xpose.msra.mxu0 0
    %1720 = vmatprep.subr.bf16.mxu0 0
    %1721 = vmatpush2.bf16.xpose.msra.mxu0 0
    %1722 = vmatprep.subr.bf16.mxu0 0
    %1723 = vmatpush2.bf16.xpose.msra.mxu0 0
    %1724 = vmatprep.subr.bf16.mxu0 0
    %1725 = vmatpush2.bf16.xpose.msra.mxu0 0
    %1726 = vmatprep.subr.bf16.mxu0 0
    %1727 = vmatpush2.bf16.xpose.msra.mxu0 0
    %1728 = vmatprep.mubr.bf16.mxu0 0
    %1729 = vmatmul.mubr.bf16.gmra.mxu0 %v1691
    %v1730 = vpop.f32.mrf.mxu0
    %v1731 = vadd.f32 %v145, %v1730
    %v1732 = vpop.f32.mrf.mxu0
    %v1733 = vpop.f32.mrf.mxu0
    %v1734 = vadd.f32 %v146, %v1733
    %v1735 = vpop.f32.mrf.mxu0
    %1736 = vdwg.mxu0
    %v1737 = vsel %vm261, %v1731, -inf
    %1738 = vmax.xlane.f32.xlu0 %v1737
    %v1739 = vpop.xlane.xlu0 %1738
    %v1740 = vsel %vm261, %v1734, -inf
    %1741 = vmax.xlane.f32.xlu0 %v1740
    %v1742 = vpop.xlane.xlu0 %1741
    %v1743 = vsub.f32 %v1731, %v1739
    %v1744 = vsub.f32 %v1734, %v1742
    %v1745 = vmul.f32 %v1743, 1.442695
    %v1746 = vpow.pop %v1745
    %v1747 = vmul.f32 %v1744, 1.442695
    %v1748 = vpow.pop %v1747
    %v1749 = vsel %vm261, %v1746, 0.0
    %1750 = vadd.xlane.f32.xlu0 %v1749
    %v1751 = vpop.xlane.xlu0 %1750
    %v1752 = vsel %vm261, %v1748, 0.0
    %1753 = vadd.xlane.f32.xlu0 %v1752
    %v1754 = vpop.xlane.xlu0 %1753
    %v1755 = vrcp.pop %v1751
    %v1756 = vmul.f32 %v1746, %v1755
    %v1757 = vrcp.pop %v1754
    %v1758 = vmul.f32 %v1748, %v1757
    %v1759 = vpack.c.bf16 %v1758, %v1756
    %1760 = vrot.lane.b32.xlu0 %v1177, 40
    %v1761 = vpop.permute.xlu0 %1760
    %v1764 = vsel %vm261, %v1759, 0
    %1766 = vmatprep.subr.bf16.mxu0 0
    %1767 = vmatpush1.bf16.msra.mxu0 0
    %1768 = vmatprep.subr.bf16.mxu0 0
    %1769 = vmatpush1.bf16.msra.mxu0 0
    %1770 = vmatprep.subr.bf16.mxu0 0
    %1771 = vmatpush1.bf16.msra.mxu0 0
    %1772 = vmatprep.subr.bf16.mxu0 0
    %1773 = vmatpush1.bf16.msra.mxu0 0
    %1774 = vmatprep.subr.bf16.mxu0 0
    %1775 = vmatpush1.bf16.msra.mxu0 0
    %1776 = vmatprep.subr.bf16.mxu0 0
    %1777 = vmatpush1.bf16.msra.mxu0 0
    %1778 = vmatprep.subr.bf16.mxu0 0
    %1779 = vmatpush1.bf16.msra.mxu0 0
    %1780 = vmatprep.subr.bf16.mxu0 0
    %1781 = vmatpush1.bf16.msra.mxu0 %v1761
    %1782 = vmatprep.subr.bf16.mxu0 0
    %1783 = vmatpush2.bf16.msra.mxu0 0
    %1784 = vmatprep.subr.bf16.mxu0 0
    %1785 = vmatpush2.bf16.msra.mxu0 0
    %1786 = vmatprep.subr.bf16.mxu0 0
    %1787 = vmatpush2.bf16.msra.mxu0 0
    %1788 = vmatprep.subr.bf16.mxu0 0
    %1789 = vmatpush2.bf16.msra.mxu0 0
    %1790 = vmatprep.subr.bf16.mxu0 0
    %1791 = vmatpush2.bf16.msra.mxu0 0
    %1792 = vmatprep.subr.bf16.mxu0 0
    %1793 = vmatpush2.bf16.msra.mxu0 0
    %1794 = vmatprep.subr.bf16.mxu0 0
    %1795 = vmatpush2.bf16.msra.mxu0 0
    %1796 = vmatprep.subr.bf16.mxu0 0
    %1797 = vmatpush2.bf16.msra.mxu0 0
    %1798 = vmatprep.mubr.bf16.mxu0 0
    %1799 = vmatmul.mubr.bf16.gmra.mxu0 %v1764
    %v1800 = vpop.f32.mrf.mxu0
    %v1801 = vadd.f32 0.0, %v1800
    %v1802 = vpop.f32.mrf.mxu0
    %v1803 = vpop.f32.mrf.mxu0
    %v1804 = vadd.f32 0.0, %v1803
    %v1805 = vpop.f32.mrf.mxu0
    %1806 = vdwg.mxu0
    %v1807 = vpack.c.bf16 %v1804, %v1801
    %v1809 = vsel %vm213, %v1807, 0
    %v1812 = vsel %vm458, %v84, 0
    %1814 = vmatprep.subr.bf16.mxu0 0
    %1815 = vmatpush1.bf16.msra.mxu0 0
    %1816 = vmatprep.subr.bf16.mxu0 0
    %1817 = vmatpush1.bf16.msra.mxu0 0
    %1818 = vmatprep.subr.bf16.mxu0 0
    %1819 = vmatpush1.bf16.msra.mxu0 0
    %1820 = vmatprep.subr.bf16.mxu0 0
    %1821 = vmatpush1.bf16.msra.mxu0 0
    %1822 = vmatprep.subr.bf16.mxu0 0
    %1823 = vmatpush1.bf16.msra.mxu0 0
    %1824 = vmatprep.subr.bf16.mxu0 0
    %1825 = vmatpush1.bf16.msra.mxu0 0
    %1826 = vmatprep.subr.bf16.mxu0 0
    %1827 = vmatpush1.bf16.msra.mxu0 0
    %1828 = vmatprep.subr.bf16.mxu0 0
    %1829 = vmatpush1.bf16.msra.mxu0 %v1812
    %1830 = vmatprep.subr.bf16.mxu0 0
    %1831 = vmatpush2.bf16.msra.mxu0 0
    %1832 = vmatprep.subr.bf16.mxu0 0
    %1833 = vmatpush2.bf16.msra.mxu0 0
    %1834 = vmatprep.subr.bf16.mxu0 0
    %1835 = vmatpush2.bf16.msra.mxu0 0
    %1836 = vmatprep.subr.bf16.mxu0 0
    %1837 = vmatpush2.bf16.msra.mxu0 0
    %1838 = vmatprep.subr.bf16.mxu0 0
    %1839 = vmatpush2.bf16.msra.mxu0 0
    %1840 = vmatprep.subr.bf16.mxu0 0
    %1841 = vmatpush2.bf16.msra.mxu0 0
    %1842 = vmatprep.subr.bf16.mxu0 0
    %1843 = vmatpush2.bf16.msra.mxu0 0
    %1844 = vmatprep.subr.bf16.mxu0 0
    %1845 = vmatpush2.bf16.msra.mxu0 0
    %1846 = vmatprep.mubr.bf16.mxu0 0
    %1847 = vmatmul.mubr.bf16.gmra.mxu0 %v1809
    %v1848 = vpop.f32.mrf.mxu0
    %v1849 = vadd.f32 0.0, %v1848
    %v1850 = vpop.f32.mrf.mxu0
    %v1851 = vpop.f32.mrf.mxu0
    %v1852 = vadd.f32 0.0, %v1851
    %v1853 = vpop.f32.mrf.mxu0
    %1854 = vdwg.mxu0
    %v1855 = vadd.f32 %v1684, %v1849
    %v1856 = vadd.f32 %v1685, %v1852
    %v1857 = vlaneseq
    %v1858 = vshrl.u32 %v1857, 7
    %v1859 = vsub.s32 1, %v1858
    %v1860 = vrot.slane %v98, %v1859
    %v1861 = vadd.f32 %v1855, %v1860
    %v1862 = vadd.f32 %v1856, %v1860
    %v1863 = vadd.f32 %v1114, %v1861
    %v1864 = vadd.f32 %v1115, %v1862
    %v1865 = vsel %vm164, %v1863, 0.0
    %1866 = vadd.xlane.f32.xlu0 %v1865
    %v1867 = vpop.xlane.xlu0 %1866
    %v1868 = vsel %vm164, %v1864, 0.0
    %1869 = vadd.xlane.f32.xlu0 %v1868
    %v1870 = vpop.xlane.xlu0 %1869
    %v1871 = vmul.f32 %v1867, %v906
    %v1872 = vmul.f32 %v1870, %v906
    %v1873 = vsub.f32 %v1863, %v1871
    %v1874 = vsub.f32 %v1864, %v1872
    %v1875 = vmul.f32 %v1873, %v1873
    %v1876 = vmul.f32 %v1874, %v1874
    %v1877 = vsel %vm164, %v1875, 0.0
    %1878 = vadd.xlane.f32.xlu0 %v1877
    %v1879 = vpop.xlane.xlu0 %1878
    %v1880 = vsel %vm164, %v1876, 0.0
    %1881 = vadd.xlane.f32.xlu0 %v1880
    %v1882 = vpop.xlane.xlu0 %1881
    %v1883 = vmul.f32 %v1879, %v906
    %v1884 = vmul.f32 %v1882, %v906
    %v1885 = vadd.f32 %v1883, 1e-05
    %v1886 = vadd.f32 %v1884, 1e-05
    %v1887 = vrsqrt.pop %v1885
    %v1888 = vrsqrt.pop %v1886
    %v1889 = vmul.f32 %v1873, %v1887
    %v1890 = vmul.f32 %v1874, %v1888
    %v1891 = vlaneseq
    %v1892 = vshrl.u32 %v1891, 7
    %v1893 = vsub.s32 4, %v1892
    %v1894 = vrot.slane %v98, %v1893
    %v1895 = vmul.f32 %v1889, %v1894
    %v1896 = vmul.f32 %v1890, %v1894
    %v1897 = vlaneseq
    %v1898 = vshrl.u32 %v1897, 7
    %v1899 = vsub.s32 5, %v1898
    %v1900 = vrot.slane %v98, %v1899
    %v1901 = vadd.f32 %v1895, %v1900
    %v1902 = vadd.f32 %v1896, %v1900
    %v1903 = vpack.c.bf16 %v1902, %v1901
    %v1904 = vlaneseq
    %v1905 = vshrl.u32 %v1904, 7
    %v1906 = vsub.s32 2, %v1905
    %v1907 = vrot.slane %v98, %v1906
    %v1912 = vunpack.c.l.b16 %v85
    %v1913 = vunpack.c.l.b16 %v86
    %v1914 = vunpack.c.l.b16 %v87
    %v1915 = vunpack.c.l.b16 %v88
    %v1916 = vpack.c.b16 %v1913, %v1912
    %v1917 = vpack.c.b16 %v1915, %v1914
    %v1921 = vsel %vm164, %v1903, 0
    %1923 = vmatprep.subr.bf16.mxu0 0
    %1924 = vmatpush1.bf16.msra.mxu0 0
    %1925 = vmatprep.subr.bf16.mxu0 0
    %1926 = vmatpush1.bf16.msra.mxu0 0
    %1927 = vmatprep.subr.bf16.mxu0 0
    %1928 = vmatpush1.bf16.msra.mxu0 0
    %1929 = vmatprep.subr.bf16.mxu0 0
    %1930 = vmatpush1.bf16.msra.mxu0 0
    %1931 = vmatprep.subr.bf16.mxu0 0
    %1932 = vmatpush1.bf16.msra.mxu0 0
    %1933 = vmatprep.subr.bf16.mxu0 0
    %1934 = vmatpush1.bf16.msra.mxu0 0
    %1935 = vmatprep.subr.bf16.mxu0 0
    %1936 = vmatpush1.bf16.msra.mxu0 %v1917
    %1937 = vmatprep.subr.bf16.mxu0 0
    %1938 = vmatpush1.bf16.msra.mxu0 %v1916
    %1939 = vmatprep.subr.bf16.mxu0 0
    %1940 = vmatpush2.bf16.msra.mxu0 0
    %1941 = vmatprep.subr.bf16.mxu0 0
    %1942 = vmatpush2.bf16.msra.mxu0 0
    %1943 = vmatprep.subr.bf16.mxu0 0
    %1944 = vmatpush2.bf16.msra.mxu0 0
    %1945 = vmatprep.subr.bf16.mxu0 0
    %1946 = vmatpush2.bf16.msra.mxu0 0
    %1947 = vmatprep.subr.bf16.mxu0 0
    %1948 = vmatpush2.bf16.msra.mxu0 0
    %1949 = vmatprep.subr.bf16.mxu0 0
    %1950 = vmatpush2.bf16.msra.mxu0 0
    %1951 = vmatprep.subr.bf16.mxu0 0
    %1952 = vmatpush2.bf16.msra.mxu0 0
    %1953 = vmatprep.subr.bf16.mxu0 0
    %1954 = vmatpush2.bf16.msra.mxu0 0
    %1955 = vmatprep.mubr.bf16.mxu0 0
    %1956 = vmatmul.mubr.bf16.gmra.mxu0 %v1921
    %v1957 = vpop.f32.mrf.mxu0
    %v1958 = vadd.f32 %v1907, %v1957
    %v1959 = vpop.f32.mrf.mxu0
    %v1960 = vpop.f32.mrf.mxu0
    %v1961 = vadd.f32 %v1907, %v1960
    %v1962 = vpop.f32.mrf.mxu0
    %1963 = vdwg.mxu0
    %v1964 = vmax.f32 %v1958, 0.0
    %v1965 = vmax.f32 %v1961, 0.0
    %v1966 = vpack.c.bf16 %v1965, %v1964
    %v1967 = vlaneseq
    %v1968 = vshrl.u32 %v1967, 7
    %v1969 = vsub.s32 3, %v1968
    %v1970 = vrot.slane %v98, %v1969
    %v1979 = vunpack.c.l.b16 %v89
    %v1980 = vunpack.c.l.b16 %v90
    %v1981 = vunpack.c.l.b16 %v91
    %v1982 = vunpack.c.l.b16 %v92
    %v1983 = vunpack.c.l.b16 %v93
    %v1984 = vunpack.c.l.b16 %v94
    %v1985 = vunpack.c.l.b16 %v95
    %v1986 = vunpack.c.l.b16 %v96
    %v1987 = vpack.c.b16 %v1980, %v1979
    %v1988 = vpack.c.b16 %v1982, %v1981
    %v1989 = vpack.c.b16 %v1984, %v1983
    %v1990 = vpack.c.b16 %v1986, %v1985
    %v1996 = vsel %vm1031, %v1966, 0
    %1998 = vmatprep.subr.bf16.mxu0 0
    %1999 = vmatpush1.bf16.msra.mxu0 0
    %2000 = vmatprep.subr.bf16.mxu0 0
    %2001 = vmatpush1.bf16.msra.mxu0 0
    %2002 = vmatprep.subr.bf16.mxu0 0
    %2003 = vmatpush1.bf16.msra.mxu0 0
    %2004 = vmatprep.subr.bf16.mxu0 0
    %2005 = vmatpush1.bf16.msra.mxu0 0
    %2006 = vmatprep.subr.bf16.mxu0 0
    %2007 = vmatpush1.bf16.msra.mxu0 %v1990
    %2008 = vmatprep.subr.bf16.mxu0 0
    %2009 = vmatpush1.bf16.msra.mxu0 %v1989
    %2010 = vmatprep.subr.bf16.mxu0 0
    %2011 = vmatpush1.bf16.msra.mxu0 %v1988
    %2012 = vmatprep.subr.bf16.mxu0 0
    %2013 = vmatpush1.bf16.msra.mxu0 %v1987
    %2014 = vmatprep.subr.bf16.mxu0 0
    %2015 = vmatpush2.bf16.msra.mxu0 0
    %2016 = vmatprep.subr.bf16.mxu0 0
    %2017 = vmatpush2.bf16.msra.mxu0 0
    %2018 = vmatprep.subr.bf16.mxu0 0
    %2019 = vmatpush2.bf16.msra.mxu0 0
    %2020 = vmatprep.subr.bf16.mxu0 0
    %2021 = vmatpush2.bf16.msra.mxu0 0
    %2022 = vmatprep.subr.bf16.mxu0 0
    %2023 = vmatpush2.bf16.msra.mxu0 0
    %2024 = vmatprep.subr.bf16.mxu0 0
    %2025 = vmatpush2.bf16.msra.mxu0 0
    %2026 = vmatprep.subr.bf16.mxu0 0
    %2027 = vmatpush2.bf16.msra.mxu0 0
    %2028 = vmatprep.subr.bf16.mxu0 0
    %2029 = vmatpush2.bf16.msra.mxu0 0
    %2030 = vmatprep.mubr.bf16.mxu0 0
    %2031 = vmatmul.mubr.bf16.gmra.mxu0 %v1996
    %v2032 = vpop.f32.mrf.mxu0
    %v2033 = vadd.f32 %v1970, %v2032
    %v2034 = vpop.f32.mrf.mxu0
    %v2035 = vpop.f32.mrf.mxu0
    %v2036 = vadd.f32 %v1970, %v2035
    %v2037 = vpop.f32.mrf.mxu0
    %2038 = vdwg.mxu0
    %v2039 = vadd.f32 %v1901, %v2033
    %v2040 = vadd.f32 %v1902, %v2036
    %v2041 = vsel %vm164, %v2039, 0.0
    %2042 = vadd.xlane.f32.xlu0 %v2041
    %v2043 = vpop.xlane.xlu0 %2042
    %v2044 = vsel %vm164, %v2040, 0.0
    %2045 = vadd.xlane.f32.xlu0 %v2044
    %v2046 = vpop.xlane.xlu0 %2045
    %v2047 = vmul.f32 %v2043, %v906
    %v2048 = vmul.f32 %v2046, %v906
    %v2049 = vsub.f32 %v2039, %v2047
    %v2050 = vsub.f32 %v2040, %v2048
    %v2051 = vmul.f32 %v2049, %v2049
    %v2052 = vmul.f32 %v2050, %v2050
    %v2053 = vsel %vm164, %v2051, 0.0
    %2054 = vadd.xlane.f32.xlu0 %v2053
    %v2055 = vpop.xlane.xlu0 %2054
    %v2056 = vsel %vm164, %v2052, 0.0
    %2057 = vadd.xlane.f32.xlu0 %v2056
    %v2058 = vpop.xlane.xlu0 %2057
    %v2059 = vmul.f32 %v2055, %v906
    %v2060 = vmul.f32 %v2058, %v906
    %v2061 = vadd.f32 %v2059, 1e-05
    %v2062 = vadd.f32 %v2060, 1e-05
    %v2063 = vrsqrt.pop %v2061
    %v2064 = vrsqrt.pop %v2062
    %v2065 = vmul.f32 %v2049, %v2063
    %v2066 = vmul.f32 %v2050, %v2064
    %v2067 = vlaneseq
    %v2068 = vshrl.u32 %v2067, 7
    %v2069 = vsub.s32 6, %v2068
    %v2070 = vrot.slane %v98, %v2069
    %v2071 = vmul.f32 %v2065, %v2070
    %v2072 = vmul.f32 %v2066, %v2070
    %v2073 = vlaneseq
    %v2074 = vshrl.u32 %v2073, 7
    %v2075 = vsub.s32 7, %v2074
    %v2076 = vrot.slane %v98, %v2075
    %v2077 = vadd.f32 %v2071, %v2076
    %v2078 = vadd.f32 %v2072, %v2076
    %v2079 = vsel %vm164, %v2077, 0.0
    %2080 = vadd.xlane.f32.xlu0 %v2079
    %v2081 = vpop.xlane.xlu0 %2080
    %v2082 = vsel %vm164, %v2078, 0.0
    %2083 = vadd.xlane.f32.xlu0 %v2082
    %v2084 = vpop.xlane.xlu0 %2083
    %v2085 = vmul.f32 %v2081, %v906
    %v2086 = vmul.f32 %v2084, %v906
    %v2087 = vsub.f32 %v2077, %v2085
    %v2088 = vsub.f32 %v2078, %v2086
    %v2089 = vmul.f32 %v2087, %v2087
    %v2090 = vmul.f32 %v2088, %v2088
    %v2091 = vsel %vm164, %v2089, 0.0
    %2092 = vadd.xlane.f32.xlu0 %v2091
    %v2093 = vpop.xlane.xlu0 %2092
    %v2094 = vsel %vm164, %v2090, 0.0
    %2095 = vadd.xlane.f32.xlu0 %v2094
    %v2096 = vpop.xlane.xlu0 %2095
    %v2097 = vmul.f32 %v2093, %v906
    %v2098 = vmul.f32 %v2096, %v906
    %v2099 = vadd.f32 %v2097, 1e-05
    %v2100 = vadd.f32 %v2098, 1e-05
    %v2101 = vrsqrt.pop %v2099
    %v2102 = vrsqrt.pop %v2100
    %v2103 = vmul.f32 %v2087, %v2101
    %v2104 = vmul.f32 %v2088, %v2102
    %v2105 = vlaneseq
    %v2106 = vshrl.u32 %v2105, 7
    %v2107 = vsub.s32 0, %v2106
    %v2108 = vrot.slane %v99, %v2107
    %v2109 = vmul.f32 %v2103, %v2108
    %v2110 = vmul.f32 %v2104, %v2108
    %v2111 = vlaneseq
    %v2112 = vshrl.u32 %v2111, 7
    %v2113 = vsub.s32 1, %v2112
    %v2114 = vrot.slane %v99, %v2113
    %v2115 = vadd.f32 %v2109, %v2114
    %v2116 = vadd.f32 %v2110, %v2114
    %2117 = vst.msk [vmem:[#allocation8] sm:$0xff] %vm164, %v2115
    %2118 = vst.msk [vmem:[#allocation8 + $0x8] sm:$0xff] %vm164, %v2116
    // Predicated region
    $region26: #{transformer_forward.1} parent=1 // pred_check
      _
    $region27: #{transformer_forward.1} parent=1 // pred_check_branch
      %2120 = sbr.rel (0) target = $region29
    $region28: #{transformer_forward.1} parent=1 // pred_region
      %s2122 = ssub.s32 256, 256
      %2123 = vsyncadd [#allocation4], %s2122
      %s2124 = sshll.u32 [#allocation8], 4
      %s2125 = int_to_ptr.vmem [resolvable:$true] %s2124
      %2130 = dma.vmem_to_hbm [thread:$0]  %s2125, 256, %s3, [#allocation4], 128, 128, 8
    $region29: #{transformer_forward.1} parent=1 // pred_fallthru
      _
    // Predicated region
    $region30: #{transformer_forward.1} parent=1 // pred_check
      _
    $region31: #{transformer_forward.1} parent=1 // pred_check_branch
      %2132 = sbr.rel (0) target = $region33
    $region32: #{transformer_forward.1} parent=1 // pred_region
      %2133 = dma.done [#allocation4], 256
    $region33: #{transformer_forward.1} parent=1 // pred_fallthru
      _
    %2134 = vsyncpa [#allocation3], 1
    %2135 = vsyncpa [#allocation6], 1
    %2136 = vsyncpa [#allocation4], 1

</llo_original>
